<compile_context>
chip_gen: v6e
topology: v6e:2x2x1
jax: 0.10.0
libtpu: 0.0.40
codegen_flags: <defaults>
</compile_context>

<pallas_src>
import functools

import jax
import jax.numpy as jnp
from jax.experimental import pallas as pl
from jax.experimental.pallas import tpu as pltpu

IN_FEATURES = 784
HIDDEN = 512
OUT_FEATURES = 10
LANE = 128  # lane-padded fc2 output width


def mlp_kernel(x_ref, w1_ref, b1_ref, w2_ref, b2_ref, o_ref):
    # fc1: (TB,784)bf16 @ (784,512)bf16 -> f32 accumulate, bias + ReLU in f32.
    h = jnp.dot(x_ref[...], w1_ref[...], preferred_element_type=jnp.float32)
    h = jnp.maximum(h + b1_ref[...], 0.0)
    # fc2: lane-padded (512,128) weight; explicit bf16 cast of activations,
    # f32 accumulate, bias add in f32.
    out = jnp.dot(h.astype(jnp.bfloat16), w2_ref[...],
                  preferred_element_type=jnp.float32)
    o_ref[...] = (out + b2_ref[...]).astype(o_ref.dtype)


def _round_up(n, m):
    return -(-n // m) * m


@functools.partial(jax.jit, static_argnames=("block_b",))
def net_forward(x, w1, b1, w2, b2, *, block_b=512):
    """x: (B, 1, 28, 28) or (B, 784) float32.  Returns (B, 10) float32.

    Weights are stored PyTorch-equivalently but transposed: w1 (784, 512),
    w2 (512, 10), so the kernel computes x @ W + b (== x @ W_torch.T + b).
    """
    x2d = x.reshape(-1, IN_FEATURES)            # glue: matches x.view(-1, 784)
    B = x2d.shape[0]

    # Batch tile: multiple of 8 (sublane), capped at block_b; pad B to it.
    tb = min(block_b, _round_up(B, 8))
    Bp = _round_up(B, tb)

    # bf16 operands for the MXU (halves x DMA bytes + resident w1 footprint);
    # biases stay f32.  fc2 weight/bias padded to 128 lanes (zeros in 10..127).
    x_bf = jnp.zeros((Bp, IN_FEATURES), jnp.bfloat16)
    x_bf = x_bf.at[:B].set(x2d.astype(jnp.bfloat16))
    w1_bf = w1.astype(jnp.bfloat16)
    w2_pad = jnp.zeros((HIDDEN, LANE), jnp.bfloat16)
    w2_pad = w2_pad.at[:, :OUT_FEATURES].set(w2.astype(jnp.bfloat16))
    b2_pad = jnp.zeros((1, LANE), jnp.float32)
    b2_pad = b2_pad.at[:, :OUT_FEATURES].set(b2)

    out_padded = pl.pallas_call(
        mlp_kernel,
        out_shape=jax.ShapeDtypeStruct((Bp, LANE), jnp.float32),
        grid_spec=pltpu.PrefetchScalarGridSpec(
            num_scalar_prefetch=0,
            grid=(Bp // tb,),
            in_specs=[
                pl.BlockSpec((tb, IN_FEATURES), lambda i: (i, 0)),     # x tile
                pl.BlockSpec((IN_FEATURES, HIDDEN), lambda i: (0, 0)),  # w1 (resident)
                pl.BlockSpec((1, HIDDEN), lambda i: (0, 0)),            # b1 (resident)
                pl.BlockSpec((HIDDEN, LANE), lambda i: (0, 0)),         # w2 (resident)
                pl.BlockSpec((1, LANE), lambda i: (0, 0)),              # b2 (resident)
            ],
            out_specs=pl.BlockSpec((tb, LANE), lambda i: (i, 0)),
        ),
        compiler_params=pltpu.CompilerParams(
            dimension_semantics=("parallel",)),
    )(x_bf, w1_bf, b1, w2_pad, b2_pad)

    # Drop batch padding and the 118 zero output lanes.
    return out_padded[:B, :OUT_FEATURES]


def init_params(key):
    """Deterministic params with the same fan-in init as the PyTorch module.

    PyTorch stores fc.weight as (out, in); we keep (in, out) for the kernel.
    """
    k1, k2, k3, k4 = jax.random.split(key, 4)
    bound1 = 1.0 / jnp.sqrt(784.0)
    w1 = jax.random.uniform(k1, (IN_FEATURES, HIDDEN), jnp.float32, -bound1, bound1)
    b1 = jax.random.uniform(k2, (1, HIDDEN), jnp.float32, -bound1, bound1)
    bound2 = 1.0 / jnp.sqrt(512.0)
    w2 = jax.random.uniform(k3, (HIDDEN, OUT_FEATURES), jnp.float32, -bound2, bound2)
    b2 = jax.random.uniform(k4, (1, OUT_FEATURES), jnp.float32, -bound2, bound2)
    return w1, b1, w2, b2


if __name__ == "__main__":
    key = jax.random.PRNGKey(0)
    kx, kp = jax.random.split(key)
    # Small MNIST-like batch: (B, C, H, W) = (2, 1, 28, 28) NCHW
    x = jax.random.normal(kx, (2, 1, 28, 28), jnp.float32)
    w1, b1, w2, b2 = init_params(kp)

    out = jax.block_until_ready(net_forward(x, w1, b1, w2, b2))

    # Plain-JAX reference doing the identical bf16-input / f32-accumulate math.
    x2d = x.reshape(-1, IN_FEATURES)
    h_ref = jnp.maximum(
        jnp.dot(x2d.astype(jnp.bfloat16), w1.astype(jnp.bfloat16),
                preferred_element_type=jnp.float32) + b1, 0.0)
    ref = jnp.dot(h_ref.astype(jnp.bfloat16), w2.astype(jnp.bfloat16),
                  preferred_element_type=jnp.float32) + b2

    assert out.shape == (2, 10)
    assert jnp.allclose(out, ref, atol=1e-2, rtol=1e-2), \
        float(jnp.max(jnp.abs(out - ref)))

    print("KERNEL_OK")
</pallas_src>

<mosaic_0001>
module attributes {stable_mosaic.version = 11 : i64} {
  func.func @mlp_kernel(%arg0: i32, %arg1: memref<8x784xbf16, #tpu.memory_space<vmem>>, %arg2: memref<784x512xbf16, #tpu.memory_space<vmem>>, %arg3: memref<1x512xf32, #tpu.memory_space<vmem>>, %arg4: memref<512x128xbf16, #tpu.memory_space<vmem>>, %arg5: memref<1x128xf32, #tpu.memory_space<vmem>>, %arg6: memref<8x128xf32, #tpu.memory_space<vmem>>) attributes {dimension_semantics = [#tpu.dimension_semantics<parallel>], iteration_bounds = array<i64: 1>, scalar_prefetch = 0 : i64, scratch_operands = 0 : i64, tpu.core_type = #tpu.core_type<tc>, window_params = [{transform_indices = @transform_0, window_bounds = array<i64: 8, 784>}, {pipeline_mode = #tpu.pipeline_mode<synchronous>, transform_indices = @transform_1, window_bounds = array<i64: 784, 512>}, {pipeline_mode = #tpu.pipeline_mode<synchronous>, transform_indices = @transform_2, window_bounds = array<i64: 1, 512>}, {pipeline_mode = #tpu.pipeline_mode<synchronous>, transform_indices = @transform_3, window_bounds = array<i64: 512, 128>}, {pipeline_mode = #tpu.pipeline_mode<synchronous>, transform_indices = @transform_4, window_bounds = array<i64: 1, 128>}, {transform_indices = @transform_5, window_bounds = array<i64: 8, 128>}]} {
    %c0 = arith.constant 0 : index
    %c0_0 = arith.constant 0 : index
    %0 = vector.load %arg1[%c0, %c0_0] : memref<8x784xbf16, #tpu.memory_space<vmem>>, vector<8x784xbf16>
    %c0_1 = arith.constant 0 : index
    %c0_2 = arith.constant 0 : index
    %1 = vector.load %arg2[%c0_1, %c0_2] : memref<784x512xbf16, #tpu.memory_space<vmem>>, vector<784x512xbf16>
    %cst = arith.constant dense<0.000000e+00> : vector<8x512xf32>
    %2 = tpu.matmul %0, %1, %cst {dimension_numbers = #tpu.dot_dimension_numbers<[1], [0], [0], [1], [0, 0, 1, 1], [], []>} : vector<8x784xbf16>, vector<784x512xbf16>, vector<8x512xf32> -> vector<8x512xf32>
    %c0_3 = arith.constant 0 : index
    %c0_4 = arith.constant 0 : index
    %3 = vector.load %arg3[%c0_3, %c0_4] : memref<1x512xf32, #tpu.memory_space<vmem>>, vector<1x512xf32>
    %4 = vector.broadcast %3 : vector<1x512xf32> to vector<8x512xf32>
    %5 = arith.addf %2, %4 : vector<8x512xf32>
    %cst_5 = arith.constant 0.000000e+00 : f32
    %6 = vector.broadcast %cst_5 : f32 to vector<8x512xf32>
    %7 = arith.maximumf %5, %6 : vector<8x512xf32>
    %8 = arith.truncf %7 : vector<8x512xf32> to vector<8x512xbf16>
    %c0_6 = arith.constant 0 : index
    %c0_7 = arith.constant 0 : index
    %9 = vector.load %arg4[%c0_6, %c0_7] : memref<512x128xbf16, #tpu.memory_space<vmem>>, vector<512x128xbf16>
    %cst_8 = arith.constant dense<0.000000e+00> : vector<8x128xf32>
    %10 = tpu.matmul %8, %9, %cst_8 {dimension_numbers = #tpu.dot_dimension_numbers<[1], [0], [0], [1], [0, 0, 1, 1], [], []>} : vector<8x512xbf16>, vector<512x128xbf16>, vector<8x128xf32> -> vector<8x128xf32>
    %c0_9 = arith.constant 0 : index
    %c0_10 = arith.constant 0 : index
    %11 = vector.load %arg5[%c0_9, %c0_10] : memref<1x128xf32, #tpu.memory_space<vmem>>, vector<1x128xf32>
    %12 = vector.broadcast %11 : vector<1x128xf32> to vector<8x128xf32>
    %13 = arith.addf %10, %12 : vector<8x128xf32>
    %c0_11 = arith.constant 0 : index
    %c0_12 = arith.constant 0 : index
    %14 = vector.load %arg6[%c0_11, %c0_12] : memref<8x128xf32, #tpu.memory_space<vmem>>, vector<8x128xf32>
    tpu.vector_store %arg6[%c0_11, %c0_12], %13 {strides = array<i32>} : memref<8x128xf32, #tpu.memory_space<vmem>>, vector<8x128xf32>,
    return
  }
  func.func @transform_0(%arg0: i32) -> (i32, i32) {
    %c0_i32 = arith.constant 0 : i32
    %c0_i32_0 = arith.constant 0 : i32
    return %arg0, %c0_i32 : i32, i32
  }
  func.func @transform_1(%arg0: i32) -> (i32, i32) {
    %c0_i32 = arith.constant 0 : i32
    %c0_i32_0 = arith.constant 0 : i32
    %c0_i32_1 = arith.constant 0 : i32
    return %c0_i32, %c0_i32_0 : i32, i32
  }
  func.func @transform_2(%arg0: i32) -> (i32, i32) {
    %c0_i32 = arith.constant 0 : i32
    %c0_i32_0 = arith.constant 0 : i32
    %c0_i32_1 = arith.constant 0 : i32
    return %c0_i32, %c0_i32_0 : i32, i32
  }
  func.func @transform_3(%arg0: i32) -> (i32, i32) {
    %c0_i32 = arith.constant 0 : i32
    %c0_i32_0 = arith.constant 0 : i32
    %c0_i32_1 = arith.constant 0 : i32
    return %c0_i32, %c0_i32_0 : i32, i32
  }
  func.func @transform_4(%arg0: i32) -> (i32, i32) {
    %c0_i32 = arith.constant 0 : i32
    %c0_i32_0 = arith.constant 0 : i32
    %c0_i32_1 = arith.constant 0 : i32
    return %c0_i32, %c0_i32_0 : i32, i32
  }
  func.func @transform_5(%arg0: i32) -> (i32, i32) {
    %c0_i32 = arith.constant 0 : i32
    %c0_i32_0 = arith.constant 0 : i32
    return %arg0, %c0_i32 : i32, i32
  }
}

</mosaic_0001>

<llo_original>
// kernel: net_forward.1
$region0: #{net_forward.1}
  #allocation0 [shape = 'u32[]', space=smem, size = 0x4, offset = 0x4, fixed_abs, tag = 'smem constant byte address 0x4 - core index']
  #allocation1 [shape = 'u32[144,128]{1,0:T(1,128)}', space=vmem, size = 0x12000, scoped, tag = 'internal scratch']
  %s0 = inlined_call_operand.vmem [shape: bf16[8,784], index: 0, kind: input, shape index: {}]
  %s1 = inlined_call_operand.vmem [shape: bf16[784,512], index: 1, kind: input, shape index: {}]
  %s2 = inlined_call_operand.vmem [shape: f32[1,512], index: 2, kind: input, shape index: {}]
  %s3 = inlined_call_operand.vmem [shape: bf16[512,128], index: 3, kind: input, shape index: {}]
  %s4 = inlined_call_operand.vmem [shape: f32[1,128], index: 4, kind: input, shape index: {}]
  %s5 = inlined_call_operand.vmem [shape: f32[8,128], index: 5, kind: output, shape index: {}]
  %s6 = sld [smem:[#allocation0]]
  $region30: #{net_forward.1} parent=0
    _
  %s8 = ssub.s32 1, %s6
  %s9 = scalar_select 0, %s8, %s6
  // Predicated region
  $region2: #{net_forward.1} parent=0 // pred_check
    _
  $region3: #{net_forward.1} parent=0 // pred_check_branch
    %11 = sbr.rel (0) target = $region5
  $region4: #{net_forward.1} parent=0 // pred_region
    _
  $region5: #{net_forward.1} parent=0 // pred_fallthru
    _
  // Predicated region
  $region6: #{net_forward.1} parent=0 // pred_check
    _
  $region7: #{net_forward.1} parent=0 // pred_check_branch
    %13 = sbr.rel (0) target = $region9
  $region8: #{net_forward.1} parent=0 // pred_region
    _
  $region9: #{net_forward.1} parent=0 // pred_fallthru
    _
  // Predicated region
  $region10: #{net_forward.1} parent=0 // pred_check
    _
  $region11: #{net_forward.1} parent=0 // pred_check_branch
    %15 = sbr.rel (0) target = $region13
  $region12: #{net_forward.1} parent=0 // pred_region
    _
  $region13: #{net_forward.1} parent=0 // pred_fallthru
    _
  // Predicated region
  $region14: #{net_forward.1} parent=0 // pred_check
    _
  $region15: #{net_forward.1} parent=0 // pred_check_branch
    %17 = sbr.rel (0) target = $region17
  $region16: #{net_forward.1} parent=0 // pred_region
    _
  $region17: #{net_forward.1} parent=0 // pred_fallthru
    _
  // Predicated region
  $region18: #{net_forward.1} parent=0 // pred_check
    _
  $region19: #{net_forward.1} parent=0 // pred_check_branch
    %19 = sbr.rel (0) target = $region21
  $region20: #{net_forward.1} parent=0 // pred_region
    _
  $region21: #{net_forward.1} parent=0 // pred_fallthru
    _
  %v21 = vld [vmem:[%s0] sm:$0xff]
  %v22 = vld [vmem:[%s0 + $0x8] sm:$0xff]
  %v23 = vld [vmem:[%s0 + $0x10] sm:$0xff]
  %v24 = vld [vmem:[%s0 + $0x18] sm:$0xf]
  %v25 = vld [vmem:[%s1] sm:$0xff]
  %v26 = vld [vmem:[%s1 + $0x8] sm:$0xff]
  %v27 = vld [vmem:[%s1 + $0x10] sm:$0xff]
  %v28 = vld [vmem:[%s1 + $0x18] sm:$0xff]
  %v29 = vld [vmem:[%s1 + $0x20] sm:$0xff]
  %v30 = vld [vmem:[%s1 + $0x28] sm:$0xff]
  %v31 = vld [vmem:[%s1 + $0x30] sm:$0xff]
  %v32 = vld [vmem:[%s1 + $0x38] sm:$0xff]
  %v33 = vld [vmem:[%s1 + $0x40] sm:$0xff]
  %v34 = vld [vmem:[%s1 + $0x48] sm:$0xff]
  %v35 = vld [vmem:[%s1 + $0x50] sm:$0xff]
  %v36 = vld [vmem:[%s1 + $0x58] sm:$0xff]
  %v37 = vld [vmem:[%s1 + $0x60] sm:$0xff]
  %v38 = vld [vmem:[%s1 + $0x68] sm:$0xff]
  %v39 = vld [vmem:[%s1 + $0x70] sm:$0xff]
  %v40 = vld [vmem:[%s1 + $0x78] sm:$0xff]
  %v41 = vld [vmem:[%s1 + $0x80] sm:$0xff]
  %v42 = vld [vmem:[%s1 + $0x88] sm:$0xff]
  %v43 = vld [vmem:[%s1 + $0x90] sm:$0xff]
  %v44 = vld [vmem:[%s1 + $0x98] sm:$0xff]
  %v45 = vld [vmem:[%s1 + $0xa0] sm:$0xff]
  %v46 = vld [vmem:[%s1 + $0xa8] sm:$0xff]
  %v47 = vld [vmem:[%s1 + $0xb0] sm:$0xff]
  %v48 = vld [vmem:[%s1 + $0xb8] sm:$0xff]
  %v49 = vld [vmem:[%s1 + $0xc0] sm:$0xff]
  %v50 = vld [vmem:[%s1 + $0xc8] sm:$0xff]
  %v51 = vld [vmem:[%s1 + $0xd0] sm:$0xff]
  %v52 = vld [vmem:[%s1 + $0xd8] sm:$0xff]
  %v53 = vld [vmem:[%s1 + $0xe0] sm:$0xff]
  %v54 = vld [vmem:[%s1 + $0xe8] sm:$0xff]
  %v55 = vld [vmem:[%s1 + $0xf0] sm:$0xff]
  %v56 = vld [vmem:[%s1 + $0xf8] sm:$0xff]
  %v57 = vld [vmem:[%s1 + $0x100] sm:$0xff]
  %v58 = vld [vmem:[%s1 + $0x108] sm:$0xff]
  %v59 = vld [vmem:[%s1 + $0x110] sm:$0xff]
  %v60 = vld [vmem:[%s1 + $0x118] sm:$0xff]
  %v61 = vld [vmem:[%s1 + $0x120] sm:$0xff]
  %v62 = vld [vmem:[%s1 + $0x128] sm:$0xff]
  %v63 = vld [vmem:[%s1 + $0x130] sm:$0xff]
  %v64 = vld [vmem:[%s1 + $0x138] sm:$0xff]
  %v65 = vld [vmem:[%s1 + $0x140] sm:$0xff]
  %v66 = vld [vmem:[%s1 + $0x148] sm:$0xff]
  %v67 = vld [vmem:[%s1 + $0x150] sm:$0xff]
  %v68 = vld [vmem:[%s1 + $0x158] sm:$0xff]
  %v69 = vld [vmem:[%s1 + $0x160] sm:$0xff]
  %v70 = vld [vmem:[%s1 + $0x168] sm:$0xff]
  %v71 = vld [vmem:[%s1 + $0x170] sm:$0xff]
  %v72 = vld [vmem:[%s1 + $0x178] sm:$0xff]
  %v73 = vld [vmem:[%s1 + $0x180] sm:$0xff]
  %v74 = vld [vmem:[%s1 + $0x188] sm:$0xff]
  %v75 = vld [vmem:[%s1 + $0x190] sm:$0xff]
  %v76 = vld [vmem:[%s1 + $0x198] sm:$0xff]
  %v77 = vld [vmem:[%s1 + $0x1a0] sm:$0xff]
  %v78 = vld [vmem:[%s1 + $0x1a8] sm:$0xff]
  %v79 = vld [vmem:[%s1 + $0x1b0] sm:$0xff]
  %v80 = vld [vmem:[%s1 + $0x1b8] sm:$0xff]
  %v81 = vld [vmem:[%s1 + $0x1c0] sm:$0xff]
  %v82 = vld [vmem:[%s1 + $0x1c8] sm:$0xff]
  %v83 = vld [vmem:[%s1 + $0x1d0] sm:$0xff]
  %v84 = vld [vmem:[%s1 + $0x1d8] sm:$0xff]
  %v85 = vld [vmem:[%s1 + $0x1e0] sm:$0xff]
  %v86 = vld [vmem:[%s1 + $0x1e8] sm:$0xff]
  %v87 = vld [vmem:[%s1 + $0x1f0] sm:$0xff]
  %v88 = vld [vmem:[%s1 + $0x1f8] sm:$0xff]
  %v89 = vld [vmem:[%s1 + $0x200] sm:$0xff]
  %v90 = vld [vmem:[%s1 + $0x208] sm:$0xff]
  %v91 = vld [vmem:[%s1 + $0x210] sm:$0xff]
  %v92 = vld [vmem:[%s1 + $0x218] sm:$0xff]
  %v93 = vld [vmem:[%s1 + $0x220] sm:$0xff]
  %v94 = vld [vmem:[%s1 + $0x228] sm:$0xff]
  %v95 = vld [vmem:[%s1 + $0x230] sm:$0xff]
  %v96 = vld [vmem:[%s1 + $0x238] sm:$0xff]
  %v97 = vld [vmem:[%s1 + $0x240] sm:$0xff]
  %v98 = vld [vmem:[%s1 + $0x248] sm:$0xff]
  %v99 = vld [vmem:[%s1 + $0x250] sm:$0xff]
  %v100 = vld [vmem:[%s1 + $0x258] sm:$0xff]
  %v101 = vld [vmem:[%s1 + $0x260] sm:$0xff]
  %v102 = vld [vmem:[%s1 + $0x268] sm:$0xff]
  %v103 = vld [vmem:[%s1 + $0x270] sm:$0xff]
  %v104 = vld [vmem:[%s1 + $0x278] sm:$0xff]
  %v105 = vld [vmem:[%s1 + $0x280] sm:$0xff]
  %v106 = vld [vmem:[%s1 + $0x288] sm:$0xff]
  %v107 = vld [vmem:[%s1 + $0x290] sm:$0xff]
  %v108 = vld [vmem:[%s1 + $0x298] sm:$0xff]
  %v109 = vld [vmem:[%s1 + $0x2a0] sm:$0xff]
  %v110 = vld [vmem:[%s1 + $0x2a8] sm:$0xff]
  %v111 = vld [vmem:[%s1 + $0x2b0] sm:$0xff]
  %v112 = vld [vmem:[%s1 + $0x2b8] sm:$0xff]
  %v113 = vld [vmem:[%s1 + $0x2c0] sm:$0xff]
  %v114 = vld [vmem:[%s1 + $0x2c8] sm:$0xff]
  %v115 = vld [vmem:[%s1 + $0x2d0] sm:$0xff]
  %v116 = vld [vmem:[%s1 + $0x2d8] sm:$0xff]
  %v117 = vld [vmem:[%s1 + $0x2e0] sm:$0xff]
  %v118 = vld [vmem:[%s1 + $0x2e8] sm:$0xff]
  %v119 = vld [vmem:[%s1 + $0x2f0] sm:$0xff]
  %v120 = vld [vmem:[%s1 + $0x2f8] sm:$0xff]
  %v121 = vld [vmem:[%s1 + $0x300] sm:$0xff]
  %v122 = vld [vmem:[%s1 + $0x308] sm:$0xff]
  %v123 = vld [vmem:[%s1 + $0x310] sm:$0xff]
  %v124 = vld [vmem:[%s1 + $0x318] sm:$0xff]
  %v125 = vld [vmem:[%s1 + $0x320] sm:$0xff]
  %v126 = vld [vmem:[%s1 + $0x328] sm:$0xff]
  %v127 = vld [vmem:[%s1 + $0x330] sm:$0xff]
  %v128 = vld [vmem:[%s1 + $0x338] sm:$0xff]
  %v129 = vld [vmem:[%s1 + $0x340] sm:$0xff]
  %v130 = vld [vmem:[%s1 + $0x348] sm:$0xff]
  %v131 = vld [vmem:[%s1 + $0x350] sm:$0xff]
  %v132 = vld [vmem:[%s1 + $0x358] sm:$0xff]
  %v133 = vld [vmem:[%s1 + $0x360] sm:$0xff]
  %v134 = vld [vmem:[%s1 + $0x368] sm:$0xff]
  %v135 = vld [vmem:[%s1 + $0x370] sm:$0xff]
  %v136 = vld [vmem:[%s1 + $0x378] sm:$0xff]
  %v137 = vld [vmem:[%s1 + $0x380] sm:$0xff]
  %v138 = vld [vmem:[%s1 + $0x388] sm:$0xff]
  %v139 = vld [vmem:[%s1 + $0x390] sm:$0xff]
  %v140 = vld [vmem:[%s1 + $0x398] sm:$0xff]
  %v141 = vld [vmem:[%s1 + $0x3a0] sm:$0xff]
  %v142 = vld [vmem:[%s1 + $0x3a8] sm:$0xff]
  %v143 = vld [vmem:[%s1 + $0x3b0] sm:$0xff]
  %v144 = vld [vmem:[%s1 + $0x3b8] sm:$0xff]
  %v145 = vld [vmem:[%s1 + $0x3c0] sm:$0xff]
  %v146 = vld [vmem:[%s1 + $0x3c8] sm:$0xff]
  %v147 = vld [vmem:[%s1 + $0x3d0] sm:$0xff]
  %v148 = vld [vmem:[%s1 + $0x3d8] sm:$0xff]
  %v149 = vld [vmem:[%s1 + $0x3e0] sm:$0xff]
  %v150 = vld [vmem:[%s1 + $0x3e8] sm:$0xff]
  %v151 = vld [vmem:[%s1 + $0x3f0] sm:$0xff]
  %v152 = vld [vmem:[%s1 + $0x3f8] sm:$0xff]
  %v153 = vld [vmem:[%s1 + $0x400] sm:$0xff]
  %v154 = vld [vmem:[%s1 + $0x408] sm:$0xff]
  %v155 = vld [vmem:[%s1 + $0x410] sm:$0xff]
  %v156 = vld [vmem:[%s1 + $0x418] sm:$0xff]
  %v157 = vld [vmem:[%s1 + $0x420] sm:$0xff]
  %v158 = vld [vmem:[%s1 + $0x428] sm:$0xff]
  %v159 = vld [vmem:[%s1 + $0x430] sm:$0xff]
  %v160 = vld [vmem:[%s1 + $0x438] sm:$0xff]
  %v161 = vld [vmem:[%s1 + $0x440] sm:$0xff]
  %v162 = vld [vmem:[%s1 + $0x448] sm:$0xff]
  %v163 = vld [vmem:[%s1 + $0x450] sm:$0xff]
  %v164 = vld [vmem:[%s1 + $0x458] sm:$0xff]
  %v165 = vld [vmem:[%s1 + $0x460] sm:$0xff]
  %v166 = vld [vmem:[%s1 + $0x468] sm:$0xff]
  %v167 = vld [vmem:[%s1 + $0x470] sm:$0xff]
  %v168 = vld [vmem:[%s1 + $0x478] sm:$0xff]
  %v169 = vld [vmem:[%s1 + $0x480] sm:$0xff]
  %v170 = vld [vmem:[%s1 + $0x488] sm:$0xff]
  %v171 = vld [vmem:[%s1 + $0x490] sm:$0xff]
  %v172 = vld [vmem:[%s1 + $0x498] sm:$0xff]
  %v173 = vld [vmem:[%s1 + $0x4a0] sm:$0xff]
  %v174 = vld [vmem:[%s1 + $0x4a8] sm:$0xff]
  %v175 = vld [vmem:[%s1 + $0x4b0] sm:$0xff]
  %v176 = vld [vmem:[%s1 + $0x4b8] sm:$0xff]
  %v177 = vld [vmem:[%s1 + $0x4c0] sm:$0xff]
  %v178 = vld [vmem:[%s1 + $0x4c8] sm:$0xff]
  %v179 = vld [vmem:[%s1 + $0x4d0] sm:$0xff]
  %v180 = vld [vmem:[%s1 + $0x4d8] sm:$0xff]
  %v181 = vld [vmem:[%s1 + $0x4e0] sm:$0xff]
  %v182 = vld [vmem:[%s1 + $0x4e8] sm:$0xff]
  %v183 = vld [vmem:[%s1 + $0x4f0] sm:$0xff]
  %v184 = vld [vmem:[%s1 + $0x4f8] sm:$0xff]
  %v185 = vld [vmem:[%s1 + $0x500] sm:$0xff]
  %v186 = vld [vmem:[%s1 + $0x508] sm:$0xff]
  %v187 = vld [vmem:[%s1 + $0x510] sm:$0xff]
  %v188 = vld [vmem:[%s1 + $0x518] sm:$0xff]
  %v189 = vld [vmem:[%s1 + $0x520] sm:$0xff]
  %v190 = vld [vmem:[%s1 + $0x528] sm:$0xff]
  %v191 = vld [vmem:[%s1 + $0x530] sm:$0xff]
  %v192 = vld [vmem:[%s1 + $0x538] sm:$0xff]
  %v193 = vld [vmem:[%s1 + $0x540] sm:$0xff]
  %v194 = vld [vmem:[%s1 + $0x548] sm:$0xff]
  %v195 = vld [vmem:[%s1 + $0x550] sm:$0xff]
  %v196 = vld [vmem:[%s1 + $0x558] sm:$0xff]
  %v197 = vld [vmem:[%s1 + $0x560] sm:$0xff]
  %v198 = vld [vmem:[%s1 + $0x568] sm:$0xff]
  %v199 = vld [vmem:[%s1 + $0x570] sm:$0xff]
  %v200 = vld [vmem:[%s1 + $0x578] sm:$0xff]
  %v201 = vld [vmem:[%s1 + $0x580] sm:$0xff]
  %v202 = vld [vmem:[%s1 + $0x588] sm:$0xff]
  %v203 = vld [vmem:[%s1 + $0x590] sm:$0xff]
  %v204 = vld [vmem:[%s1 + $0x598] sm:$0xff]
  %v205 = vld [vmem:[%s1 + $0x5a0] sm:$0xff]
  %v206 = vld [vmem:[%s1 + $0x5a8] sm:$0xff]
  %v207 = vld [vmem:[%s1 + $0x5b0] sm:$0xff]
  %v208 = vld [vmem:[%s1 + $0x5b8] sm:$0xff]
  %v209 = vld [vmem:[%s1 + $0x5c0] sm:$0xff]
  %v210 = vld [vmem:[%s1 + $0x5c8] sm:$0xff]
  %v211 = vld [vmem:[%s1 + $0x5d0] sm:$0xff]
  %v212 = vld [vmem:[%s1 + $0x5d8] sm:$0xff]
  %v213 = vld [vmem:[%s1 + $0x5e0] sm:$0xff]
  %v214 = vld [vmem:[%s1 + $0x5e8] sm:$0xff]
  %v215 = vld [vmem:[%s1 + $0x5f0] sm:$0xff]
  %v216 = vld [vmem:[%s1 + $0x5f8] sm:$0xff]
  %v217 = vld [vmem:[%s1 + $0x600] sm:$0xff]
  %v218 = vld [vmem:[%s1 + $0x608] sm:$0xff]
  %v219 = vld [vmem:[%s1 + $0x610] sm:$0xff]
  %v220 = vld [vmem:[%s1 + $0x618] sm:$0xff]
  %v221 = vld [vmem:[%s2] sm:$0xf]
  %v223 = vlaneseq
  %v224 = vshrl.u32 %v223, 7
  %v225 = vsub.s32 0, %v224
  %v226 = vrot.slane %v221, %v225
  %v227 = vlaneseq
  %v228 = vshrl.u32 %v227, 7
  %v229 = vsub.s32 1, %v228
  %v230 = vrot.slane %v221, %v229
  %v231 = vlaneseq
  %v232 = vshrl.u32 %v231, 7
  %v233 = vsub.s32 2, %v232
  %v234 = vrot.slane %v221, %v233
  %v235 = vlaneseq
  %v236 = vshrl.u32 %v235, 7
  %v237 = vsub.s32 3, %v236
  %v238 = vrot.slane %v221, %v237
  %v247 = vunpack.c.l.b16 %v21
  %v248 = vunpack.c.h.b16 %v21
  %v249 = vunpack.c.l.b16 %v22
  %v250 = vunpack.c.h.b16 %v22
  %v251 = vunpack.c.l.b16 %v23
  %v252 = vunpack.c.h.b16 %v23
  %v253 = vunpack.c.l.b16 %v24
  %v254 = vpack.c.b16 %v247, %v247
  %v255 = vpack.c.b16 %v248, %v248
  %v256 = vpack.c.b16 %v249, %v249
  %v257 = vpack.c.b16 %v250, %v250
  %v258 = vpack.c.b16 %v251, %v251
  %v259 = vpack.c.b16 %v252, %v252
  %v260 = vpack.c.b16 %v253, %v253
  %v463 = vunpack.c.l.b16 %v25
  %v464 = vunpack.c.h.b16 %v25
  %v465 = vunpack.c.l.b16 %v26
  %v466 = vunpack.c.h.b16 %v26
  %v467 = vunpack.c.l.b16 %v27
  %v468 = vunpack.c.h.b16 %v27
  %v469 = vunpack.c.l.b16 %v28
  %v470 = vunpack.c.h.b16 %v28
  %v471 = vunpack.c.l.b16 %v29
  %v472 = vunpack.c.h.b16 %v29
  %v473 = vunpack.c.l.b16 %v30
  %v474 = vunpack.c.h.b16 %v30
  %v475 = vunpack.c.l.b16 %v31
  %v476 = vunpack.c.h.b16 %v31
  %v477 = vunpack.c.l.b16 %v32
  %v478 = vunpack.c.h.b16 %v32
  %v479 = vunpack.c.l.b16 %v33
  %v480 = vunpack.c.h.b16 %v33
  %v481 = vunpack.c.l.b16 %v34
  %v482 = vunpack.c.h.b16 %v34
  %v483 = vunpack.c.l.b16 %v35
  %v484 = vunpack.c.h.b16 %v35
  %v485 = vunpack.c.l.b16 %v36
  %v486 = vunpack.c.h.b16 %v36
  %v487 = vunpack.c.l.b16 %v37
  %v488 = vunpack.c.h.b16 %v37
  %v489 = vunpack.c.l.b16 %v38
  %v490 = vunpack.c.h.b16 %v38
  %v491 = vunpack.c.l.b16 %v39
  %v492 = vunpack.c.h.b16 %v39
  %v493 = vunpack.c.l.b16 %v40
  %v494 = vunpack.c.h.b16 %v40
  %v495 = vunpack.c.l.b16 %v41
  %v496 = vunpack.c.h.b16 %v41
  %v497 = vunpack.c.l.b16 %v42
  %v498 = vunpack.c.h.b16 %v42
  %v499 = vunpack.c.l.b16 %v43
  %v500 = vunpack.c.h.b16 %v43
  %v501 = vunpack.c.l.b16 %v44
  %v502 = vunpack.c.h.b16 %v44
  %v503 = vunpack.c.l.b16 %v45
  %v504 = vunpack.c.h.b16 %v45
  %v505 = vunpack.c.l.b16 %v46
  %v506 = vunpack.c.h.b16 %v46
  %v507 = vunpack.c.l.b16 %v47
  %v508 = vunpack.c.h.b16 %v47
  %v509 = vunpack.c.l.b16 %v48
  %v510 = vunpack.c.h.b16 %v48
  %v511 = vunpack.c.l.b16 %v49
  %v512 = vunpack.c.h.b16 %v49
  %v513 = vunpack.c.l.b16 %v50
  %v514 = vunpack.c.h.b16 %v50
  %v515 = vunpack.c.l.b16 %v51
  %v516 = vunpack.c.h.b16 %v51
  %v517 = vunpack.c.l.b16 %v52
  %v518 = vunpack.c.h.b16 %v52
  %v519 = vunpack.c.l.b16 %v53
  %v520 = vunpack.c.h.b16 %v53
  %v521 = vunpack.c.l.b16 %v54
  %v522 = vunpack.c.h.b16 %v54
  %v523 = vunpack.c.l.b16 %v55
  %v524 = vunpack.c.h.b16 %v55
  %v525 = vunpack.c.l.b16 %v56
  %v526 = vunpack.c.h.b16 %v56
  %v527 = vunpack.c.l.b16 %v57
  %v528 = vunpack.c.h.b16 %v57
  %v529 = vunpack.c.l.b16 %v58
  %v530 = vunpack.c.h.b16 %v58
  %v531 = vunpack.c.l.b16 %v59
  %v532 = vunpack.c.h.b16 %v59
  %v533 = vunpack.c.l.b16 %v60
  %v534 = vunpack.c.h.b16 %v60
  %v535 = vunpack.c.l.b16 %v61
  %v536 = vunpack.c.h.b16 %v61
  %v537 = vunpack.c.l.b16 %v62
  %v538 = vunpack.c.h.b16 %v62
  %v539 = vunpack.c.l.b16 %v63
  %v540 = vunpack.c.h.b16 %v63
  %v541 = vunpack.c.l.b16 %v64
  %v542 = vunpack.c.h.b16 %v64
  %v543 = vunpack.c.l.b16 %v65
  %v544 = vunpack.c.h.b16 %v65
  %v545 = vunpack.c.l.b16 %v66
  %v546 = vunpack.c.h.b16 %v66
  %v547 = vunpack.c.l.b16 %v67
  %v548 = vunpack.c.h.b16 %v67
  %v549 = vunpack.c.l.b16 %v68
  %v550 = vunpack.c.h.b16 %v68
  %v551 = vunpack.c.l.b16 %v69
  %v552 = vunpack.c.h.b16 %v69
  %v553 = vunpack.c.l.b16 %v70
  %v554 = vunpack.c.h.b16 %v70
  %v555 = vunpack.c.l.b16 %v71
  %v556 = vunpack.c.h.b16 %v71
  %v557 = vunpack.c.l.b16 %v72
  %v558 = vunpack.c.h.b16 %v72
  %v559 = vunpack.c.l.b16 %v73
  %v560 = vunpack.c.h.b16 %v73
  %v561 = vunpack.c.l.b16 %v74
  %v562 = vunpack.c.h.b16 %v74
  %v563 = vunpack.c.l.b16 %v75
  %v564 = vunpack.c.h.b16 %v75
  %v565 = vunpack.c.l.b16 %v76
  %v566 = vunpack.c.h.b16 %v76
  %v567 = vunpack.c.l.b16 %v77
  %v568 = vunpack.c.h.b16 %v77
  %v569 = vunpack.c.l.b16 %v78
  %v570 = vunpack.c.h.b16 %v78
  %v571 = vunpack.c.l.b16 %v79
  %v572 = vunpack.c.h.b16 %v79
  %v573 = vunpack.c.l.b16 %v80
  %v574 = vunpack.c.h.b16 %v80
  %v575 = vunpack.c.l.b16 %v81
  %v576 = vunpack.c.h.b16 %v81
  %v577 = vunpack.c.l.b16 %v82
  %v578 = vunpack.c.h.b16 %v82
  %v579 = vunpack.c.l.b16 %v83
  %v580 = vunpack.c.h.b16 %v83
  %v581 = vunpack.c.l.b16 %v84
  %v582 = vunpack.c.h.b16 %v84
  %v583 = vunpack.c.l.b16 %v85
  %v584 = vunpack.c.h.b16 %v85
  %v585 = vunpack.c.l.b16 %v86
  %v586 = vunpack.c.h.b16 %v86
  %v587 = vunpack.c.l.b16 %v87
  %v588 = vunpack.c.h.b16 %v87
  %v589 = vunpack.c.l.b16 %v88
  %v590 = vunpack.c.h.b16 %v88
  %v591 = vunpack.c.l.b16 %v89
  %v592 = vunpack.c.h.b16 %v89
  %v593 = vunpack.c.l.b16 %v90
  %v594 = vunpack.c.h.b16 %v90
  %v595 = vunpack.c.l.b16 %v91
  %v596 = vunpack.c.h.b16 %v91
  %v597 = vunpack.c.l.b16 %v92
  %v598 = vunpack.c.h.b16 %v92
  %v599 = vunpack.c.l.b16 %v93
  %v600 = vunpack.c.h.b16 %v93
  %v601 = vunpack.c.l.b16 %v94
  %v602 = vunpack.c.h.b16 %v94
  %v603 = vunpack.c.l.b16 %v95
  %v604 = vunpack.c.h.b16 %v95
  %v605 = vunpack.c.l.b16 %v96
  %v606 = vunpack.c.h.b16 %v96
  %v607 = vunpack.c.l.b16 %v97
  %v608 = vunpack.c.h.b16 %v97
  %v609 = vunpack.c.l.b16 %v98
  %v610 = vunpack.c.h.b16 %v98
  %v611 = vunpack.c.l.b16 %v99
  %v612 = vunpack.c.h.b16 %v99
  %v613 = vunpack.c.l.b16 %v100
  %v614 = vunpack.c.h.b16 %v100
  %v615 = vunpack.c.l.b16 %v101
  %v616 = vunpack.c.h.b16 %v101
  %v617 = vunpack.c.l.b16 %v102
  %v618 = vunpack.c.h.b16 %v102
  %v619 = vunpack.c.l.b16 %v103
  %v620 = vunpack.c.h.b16 %v103
  %v621 = vunpack.c.l.b16 %v104
  %v622 = vunpack.c.h.b16 %v104
  %v623 = vunpack.c.l.b16 %v105
  %v624 = vunpack.c.h.b16 %v105
  %v625 = vunpack.c.l.b16 %v106
  %v626 = vunpack.c.h.b16 %v106
  %v627 = vunpack.c.l.b16 %v107
  %v628 = vunpack.c.h.b16 %v107
  %v629 = vunpack.c.l.b16 %v108
  %v630 = vunpack.c.h.b16 %v108
  %v631 = vunpack.c.l.b16 %v109
  %v632 = vunpack.c.h.b16 %v109
  %v633 = vunpack.c.l.b16 %v110
  %v634 = vunpack.c.h.b16 %v110
  %v635 = vunpack.c.l.b16 %v111
  %v636 = vunpack.c.h.b16 %v111
  %v637 = vunpack.c.l.b16 %v112
  %v638 = vunpack.c.h.b16 %v112
  %v639 = vunpack.c.l.b16 %v113
  %v640 = vunpack.c.h.b16 %v113
  %v641 = vunpack.c.l.b16 %v114
  %v642 = vunpack.c.h.b16 %v114
  %v643 = vunpack.c.l.b16 %v115
  %v644 = vunpack.c.h.b16 %v115
  %v645 = vunpack.c.l.b16 %v116
  %v646 = vunpack.c.h.b16 %v116
  %v647 = vunpack.c.l.b16 %v117
  %v648 = vunpack.c.h.b16 %v117
  %v649 = vunpack.c.l.b16 %v118
  %v650 = vunpack.c.h.b16 %v118
  %v651 = vunpack.c.l.b16 %v119
  %v652 = vunpack.c.h.b16 %v119
  %v653 = vunpack.c.l.b16 %v120
  %v654 = vunpack.c.h.b16 %v120
  %v655 = vunpack.c.l.b16 %v121
  %v656 = vunpack.c.h.b16 %v121
  %v657 = vunpack.c.l.b16 %v122
  %v658 = vunpack.c.h.b16 %v122
  %v659 = vunpack.c.l.b16 %v123
  %v660 = vunpack.c.h.b16 %v123
  %v661 = vunpack.c.l.b16 %v124
  %v662 = vunpack.c.h.b16 %v124
  %v663 = vunpack.c.l.b16 %v125
  %v664 = vunpack.c.h.b16 %v125
  %v665 = vunpack.c.l.b16 %v126
  %v666 = vunpack.c.h.b16 %v126
  %v667 = vunpack.c.l.b16 %v127
  %v668 = vunpack.c.h.b16 %v127
  %v669 = vunpack.c.l.b16 %v128
  %v670 = vunpack.c.h.b16 %v128
  %v671 = vunpack.c.l.b16 %v129
  %v672 = vunpack.c.h.b16 %v129
  %v673 = vunpack.c.l.b16 %v130
  %v674 = vunpack.c.h.b16 %v130
  %v675 = vunpack.c.l.b16 %v131
  %v676 = vunpack.c.h.b16 %v131
  %v677 = vunpack.c.l.b16 %v132
  %v678 = vunpack.c.h.b16 %v132
  %v679 = vunpack.c.l.b16 %v133
  %v680 = vunpack.c.h.b16 %v133
  %v681 = vunpack.c.l.b16 %v134
  %v682 = vunpack.c.h.b16 %v134
  %v683 = vunpack.c.l.b16 %v135
  %v684 = vunpack.c.h.b16 %v135
  %v685 = vunpack.c.l.b16 %v136
  %v686 = vunpack.c.h.b16 %v136
  %v687 = vunpack.c.l.b16 %v137
  %v688 = vunpack.c.h.b16 %v137
  %v689 = vunpack.c.l.b16 %v138
  %v690 = vunpack.c.h.b16 %v138
  %v691 = vunpack.c.l.b16 %v139
  %v692 = vunpack.c.h.b16 %v139
  %v693 = vunpack.c.l.b16 %v140
  %v694 = vunpack.c.h.b16 %v140
  %v695 = vunpack.c.l.b16 %v141
  %v696 = vunpack.c.h.b16 %v141
  %v697 = vunpack.c.l.b16 %v142
  %v698 = vunpack.c.h.b16 %v142
  %v699 = vunpack.c.l.b16 %v143
  %v700 = vunpack.c.h.b16 %v143
  %v701 = vunpack.c.l.b16 %v144
  %v702 = vunpack.c.h.b16 %v144
  %v703 = vunpack.c.l.b16 %v145
  %v704 = vunpack.c.h.b16 %v145
  %v705 = vunpack.c.l.b16 %v146
  %v706 = vunpack.c.h.b16 %v146
  %v707 = vunpack.c.l.b16 %v147
  %v708 = vunpack.c.h.b16 %v147
  %v709 = vunpack.c.l.b16 %v148
  %v710 = vunpack.c.h.b16 %v148
  %v711 = vunpack.c.l.b16 %v149
  %v712 = vunpack.c.h.b16 %v149
  %v713 = vunpack.c.l.b16 %v150
  %v714 = vunpack.c.h.b16 %v150
  %v715 = vunpack.c.l.b16 %v151
  %v716 = vunpack.c.h.b16 %v151
  %v717 = vunpack.c.l.b16 %v152
  %v718 = vunpack.c.h.b16 %v152
  %v719 = vunpack.c.l.b16 %v153
  %v720 = vunpack.c.h.b16 %v153
  %v721 = vunpack.c.l.b16 %v154
  %v722 = vunpack.c.h.b16 %v154
  %v723 = vunpack.c.l.b16 %v155
  %v724 = vunpack.c.h.b16 %v155
  %v725 = vunpack.c.l.b16 %v156
  %v726 = vunpack.c.h.b16 %v156
  %v727 = vunpack.c.l.b16 %v157
  %v728 = vunpack.c.h.b16 %v157
  %v729 = vunpack.c.l.b16 %v158
  %v730 = vunpack.c.h.b16 %v158
  %v731 = vunpack.c.l.b16 %v159
  %v732 = vunpack.c.h.b16 %v159
  %v733 = vunpack.c.l.b16 %v160
  %v734 = vunpack.c.h.b16 %v160
  %v735 = vunpack.c.l.b16 %v161
  %v736 = vunpack.c.h.b16 %v161
  %v737 = vunpack.c.l.b16 %v162
  %v738 = vunpack.c.h.b16 %v162
  %v739 = vunpack.c.l.b16 %v163
  %v740 = vunpack.c.h.b16 %v163
  %v741 = vunpack.c.l.b16 %v164
  %v742 = vunpack.c.h.b16 %v164
  %v743 = vunpack.c.l.b16 %v165
  %v744 = vunpack.c.h.b16 %v165
  %v745 = vunpack.c.l.b16 %v166
  %v746 = vunpack.c.h.b16 %v166
  %v747 = vunpack.c.l.b16 %v167
  %v748 = vunpack.c.h.b16 %v167
  %v749 = vunpack.c.l.b16 %v168
  %v750 = vunpack.c.h.b16 %v168
  %v751 = vunpack.c.l.b16 %v169
  %v752 = vunpack.c.h.b16 %v169
  %v753 = vunpack.c.l.b16 %v170
  %v754 = vunpack.c.h.b16 %v170
  %v755 = vunpack.c.l.b16 %v171
  %v756 = vunpack.c.h.b16 %v171
  %v757 = vunpack.c.l.b16 %v172
  %v758 = vunpack.c.h.b16 %v172
  %v759 = vunpack.c.l.b16 %v173
  %v760 = vunpack.c.h.b16 %v173
  %v761 = vunpack.c.l.b16 %v174
  %v762 = vunpack.c.h.b16 %v174
  %v763 = vunpack.c.l.b16 %v175
  %v764 = vunpack.c.h.b16 %v175
  %v765 = vunpack.c.l.b16 %v176
  %v766 = vunpack.c.h.b16 %v176
  %v767 = vunpack.c.l.b16 %v177
  %v768 = vunpack.c.h.b16 %v177
  %v769 = vunpack.c.l.b16 %v178
  %v770 = vunpack.c.h.b16 %v178
  %v771 = vunpack.c.l.b16 %v179
  %v772 = vunpack.c.h.b16 %v179
  %v773 = vunpack.c.l.b16 %v180
  %v774 = vunpack.c.h.b16 %v180
  %v775 = vunpack.c.l.b16 %v181
  %v776 = vunpack.c.h.b16 %v181
  %v777 = vunpack.c.l.b16 %v182
  %v778 = vunpack.c.h.b16 %v182
  %v779 = vunpack.c.l.b16 %v183
  %v780 = vunpack.c.h.b16 %v183
  %v781 = vunpack.c.l.b16 %v184
  %v782 = vunpack.c.h.b16 %v184
  %v783 = vunpack.c.l.b16 %v185
  %v784 = vunpack.c.h.b16 %v185
  %v785 = vunpack.c.l.b16 %v186
  %v786 = vunpack.c.h.b16 %v186
  %v787 = vunpack.c.l.b16 %v187
  %v788 = vunpack.c.h.b16 %v187
  %v789 = vunpack.c.l.b16 %v188
  %v790 = vunpack.c.h.b16 %v188
  %v791 = vunpack.c.l.b16 %v189
  %v792 = vunpack.c.h.b16 %v189
  %v793 = vunpack.c.l.b16 %v190
  %v794 = vunpack.c.h.b16 %v190
  %v795 = vunpack.c.l.b16 %v191
  %v796 = vunpack.c.h.b16 %v191
  %v797 = vunpack.c.l.b16 %v192
  %v798 = vunpack.c.h.b16 %v192
  %v799 = vunpack.c.l.b16 %v193
  %v800 = vunpack.c.h.b16 %v193
  %v801 = vunpack.c.l.b16 %v194
  %v802 = vunpack.c.h.b16 %v194
  %v803 = vunpack.c.l.b16 %v195
  %v804 = vunpack.c.h.b16 %v195
  %v805 = vunpack.c.l.b16 %v196
  %v806 = vunpack.c.h.b16 %v196
  %v807 = vunpack.c.l.b16 %v197
  %v808 = vunpack.c.h.b16 %v197
  %v809 = vunpack.c.l.b16 %v198
  %v810 = vunpack.c.h.b16 %v198
  %v811 = vunpack.c.l.b16 %v199
  %v812 = vunpack.c.h.b16 %v199
  %v813 = vunpack.c.l.b16 %v200
  %v814 = vunpack.c.h.b16 %v200
  %v815 = vunpack.c.l.b16 %v201
  %v816 = vunpack.c.h.b16 %v201
  %v817 = vunpack.c.l.b16 %v202
  %v818 = vunpack.c.h.b16 %v202
  %v819 = vunpack.c.l.b16 %v203
  %v820 = vunpack.c.h.b16 %v203
  %v821 = vunpack.c.l.b16 %v204
  %v822 = vunpack.c.h.b16 %v204
  %v823 = vunpack.c.l.b16 %v205
  %v824 = vunpack.c.h.b16 %v205
  %v825 = vunpack.c.l.b16 %v206
  %v826 = vunpack.c.h.b16 %v206
  %v827 = vunpack.c.l.b16 %v207
  %v828 = vunpack.c.h.b16 %v207
  %v829 = vunpack.c.l.b16 %v208
  %v830 = vunpack.c.h.b16 %v208
  %v831 = vunpack.c.l.b16 %v209
  %v832 = vunpack.c.h.b16 %v209
  %v833 = vunpack.c.l.b16 %v210
  %v834 = vunpack.c.h.b16 %v210
  %v835 = vunpack.c.l.b16 %v211
  %v836 = vunpack.c.h.b16 %v211
  %v837 = vunpack.c.l.b16 %v212
  %v838 = vunpack.c.h.b16 %v212
  %v839 = vunpack.c.l.b16 %v213
  %v840 = vunpack.c.h.b16 %v213
  %v841 = vunpack.c.l.b16 %v214
  %v842 = vunpack.c.h.b16 %v214
  %v843 = vunpack.c.l.b16 %v215
  %v844 = vunpack.c.h.b16 %v215
  %v845 = vunpack.c.l.b16 %v216
  %v846 = vunpack.c.h.b16 %v216
  %v847 = vunpack.c.l.b16 %v217
  %v848 = vunpack.c.h.b16 %v217
  %v849 = vunpack.c.l.b16 %v218
  %v850 = vunpack.c.h.b16 %v218
  %v851 = vunpack.c.l.b16 %v219
  %v852 = vunpack.c.h.b16 %v219
  %v853 = vunpack.c.l.b16 %v220
  %v854 = vunpack.c.h.b16 %v220
  %v855 = vpack.c.b16 %v467, %v463
  %v856 = vpack.c.b16 %v468, %v464
  %v857 = vpack.c.b16 %v469, %v465
  %v858 = vpack.c.b16 %v470, %v466
  %v859 = vpack.c.b16 %v475, %v471
  %v860 = vpack.c.b16 %v476, %v472
  %v861 = vpack.c.b16 %v477, %v473
  %v862 = vpack.c.b16 %v478, %v474
  %v863 = vpack.c.b16 %v483, %v479
  %v864 = vpack.c.b16 %v484, %v480
  %v865 = vpack.c.b16 %v485, %v481
  %v866 = vpack.c.b16 %v486, %v482
  %v867 = vpack.c.b16 %v491, %v487
  %v868 = vpack.c.b16 %v492, %v488
  %v869 = vpack.c.b16 %v493, %v489
  %v870 = vpack.c.b16 %v494, %v490
  %v871 = vpack.c.b16 %v499, %v495
  %v872 = vpack.c.b16 %v500, %v496
  %v873 = vpack.c.b16 %v501, %v497
  %v874 = vpack.c.b16 %v502, %v498
  %v875 = vpack.c.b16 %v507, %v503
  %v876 = vpack.c.b16 %v508, %v504
  %v877 = vpack.c.b16 %v509, %v505
  %v878 = vpack.c.b16 %v510, %v506
  %v879 = vpack.c.b16 %v515, %v511
  %v880 = vpack.c.b16 %v516, %v512
  %v881 = vpack.c.b16 %v517, %v513
  %v882 = vpack.c.b16 %v518, %v514
  %v883 = vpack.c.b16 %v523, %v519
  %v884 = vpack.c.b16 %v524, %v520
  %v885 = vpack.c.b16 %v525, %v521
  %v886 = vpack.c.b16 %v526, %v522
  %v887 = vpack.c.b16 %v531, %v527
  %v888 = vpack.c.b16 %v532, %v528
  %v889 = vpack.c.b16 %v533, %v529
  %v890 = vpack.c.b16 %v534, %v530
  %v891 = vpack.c.b16 %v539, %v535
  %v892 = vpack.c.b16 %v540, %v536
  %v893 = vpack.c.b16 %v541, %v537
  %v894 = vpack.c.b16 %v542, %v538
  %v895 = vpack.c.b16 %v547, %v543
  %v896 = vpack.c.b16 %v548, %v544
  %v897 = vpack.c.b16 %v549, %v545
  %v898 = vpack.c.b16 %v550, %v546
  %v899 = vpack.c.b16 %v555, %v551
  %v900 = vpack.c.b16 %v556, %v552
  %v901 = vpack.c.b16 %v557, %v553
  %v902 = vpack.c.b16 %v558, %v554
  %v903 = vpack.c.b16 %v563, %v559
  %v904 = vpack.c.b16 %v564, %v560
  %v905 = vpack.c.b16 %v565, %v561
  %v906 = vpack.c.b16 %v566, %v562
  %v907 = vpack.c.b16 %v571, %v567
  %v908 = vpack.c.b16 %v572, %v568
  %v909 = vpack.c.b16 %v573, %v569
  %v910 = vpack.c.b16 %v574, %v570
  %v911 = vpack.c.b16 %v579, %v575
  %v912 = vpack.c.b16 %v580, %v576
  %v913 = vpack.c.b16 %v581, %v577
  %v914 = vpack.c.b16 %v582, %v578
  %v915 = vpack.c.b16 %v587, %v583
  %v916 = vpack.c.b16 %v588, %v584
  %v917 = vpack.c.b16 %v589, %v585
  %v918 = vpack.c.b16 %v590, %v586
  %v919 = vpack.c.b16 %v595, %v591
  %v920 = vpack.c.b16 %v596, %v592
  %v921 = vpack.c.b16 %v597, %v593
  %v922 = vpack.c.b16 %v598, %v594
  %v923 = vpack.c.b16 %v603, %v599
  %v924 = vpack.c.b16 %v604, %v600
  %v925 = vpack.c.b16 %v605, %v601
  %v926 = vpack.c.b16 %v606, %v602
  %v927 = vpack.c.b16 %v611, %v607
  %v928 = vpack.c.b16 %v612, %v608
  %v929 = vpack.c.b16 %v613, %v609
  %v930 = vpack.c.b16 %v614, %v610
  %v931 = vpack.c.b16 %v619, %v615
  %v932 = vpack.c.b16 %v620, %v616
  %v933 = vpack.c.b16 %v621, %v617
  %v934 = vpack.c.b16 %v622, %v618
  %v935 = vpack.c.b16 %v627, %v623
  %v936 = vpack.c.b16 %v628, %v624
  %v937 = vpack.c.b16 %v629, %v625
  %v938 = vpack.c.b16 %v630, %v626
  %v939 = vpack.c.b16 %v635, %v631
  %v940 = vpack.c.b16 %v636, %v632
  %v941 = vpack.c.b16 %v637, %v633
  %v942 = vpack.c.b16 %v638, %v634
  %v943 = vpack.c.b16 %v643, %v639
  %v944 = vpack.c.b16 %v644, %v640
  %v945 = vpack.c.b16 %v645, %v641
  %v946 = vpack.c.b16 %v646, %v642
  %v947 = vpack.c.b16 %v651, %v647
  %v948 = vpack.c.b16 %v652, %v648
  %v949 = vpack.c.b16 %v653, %v649
  %v950 = vpack.c.b16 %v654, %v650
  %v951 = vpack.c.b16 %v659, %v655
  %v952 = vpack.c.b16 %v660, %v656
  %v953 = vpack.c.b16 %v661, %v657
  %v954 = vpack.c.b16 %v662, %v658
  %v955 = vpack.c.b16 %v667, %v663
  %v956 = vpack.c.b16 %v668, %v664
  %v957 = vpack.c.b16 %v669, %v665
  %v958 = vpack.c.b16 %v670, %v666
  %v959 = vpack.c.b16 %v675, %v671
  %v960 = vpack.c.b16 %v676, %v672
  %v961 = vpack.c.b16 %v677, %v673
  %v962 = vpack.c.b16 %v678, %v674
  %v963 = vpack.c.b16 %v683, %v679
  %v964 = vpack.c.b16 %v684, %v680
  %v965 = vpack.c.b16 %v685, %v681
  %v966 = vpack.c.b16 %v686, %v682
  %v967 = vpack.c.b16 %v691, %v687
  %v968 = vpack.c.b16 %v692, %v688
  %v969 = vpack.c.b16 %v693, %v689
  %v970 = vpack.c.b16 %v694, %v690
  %v971 = vpack.c.b16 %v699, %v695
  %v972 = vpack.c.b16 %v700, %v696
  %v973 = vpack.c.b16 %v701, %v697
  %v974 = vpack.c.b16 %v702, %v698
  %v975 = vpack.c.b16 %v707, %v703
  %v976 = vpack.c.b16 %v708, %v704
  %v977 = vpack.c.b16 %v709, %v705
  %v978 = vpack.c.b16 %v710, %v706
  %v979 = vpack.c.b16 %v715, %v711
  %v980 = vpack.c.b16 %v716, %v712
  %v981 = vpack.c.b16 %v717, %v713
  %v982 = vpack.c.b16 %v718, %v714
  %v983 = vpack.c.b16 %v723, %v719
  %v984 = vpack.c.b16 %v724, %v720
  %v985 = vpack.c.b16 %v725, %v721
  %v986 = vpack.c.b16 %v726, %v722
  %v987 = vpack.c.b16 %v731, %v727
  %v988 = vpack.c.b16 %v732, %v728
  %v989 = vpack.c.b16 %v733, %v729
  %v990 = vpack.c.b16 %v734, %v730
  %v991 = vpack.c.b16 %v739, %v735
  %v992 = vpack.c.b16 %v740, %v736
  %v993 = vpack.c.b16 %v741, %v737
  %v994 = vpack.c.b16 %v742, %v738
  %v995 = vpack.c.b16 %v747, %v743
  %v996 = vpack.c.b16 %v748, %v744
  %v997 = vpack.c.b16 %v749, %v745
  %v998 = vpack.c.b16 %v750, %v746
  %v999 = vpack.c.b16 %v755, %v751
  %v1000 = vpack.c.b16 %v756, %v752
  %v1001 = vpack.c.b16 %v757, %v753
  %v1002 = vpack.c.b16 %v758, %v754
  %v1003 = vpack.c.b16 %v763, %v759
  %v1004 = vpack.c.b16 %v764, %v760
  %v1005 = vpack.c.b16 %v765, %v761
  %v1006 = vpack.c.b16 %v766, %v762
  %v1007 = vpack.c.b16 %v771, %v767
  %v1008 = vpack.c.b16 %v772, %v768
  %v1009 = vpack.c.b16 %v773, %v769
  %v1010 = vpack.c.b16 %v774, %v770
  %v1011 = vpack.c.b16 %v779, %v775
  %v1012 = vpack.c.b16 %v780, %v776
  %v1013 = vpack.c.b16 %v781, %v777
  %v1014 = vpack.c.b16 %v782, %v778
  %v1015 = vpack.c.b16 %v787, %v783
  %v1016 = vpack.c.b16 %v788, %v784
  %v1017 = vpack.c.b16 %v789, %v785
  %v1018 = vpack.c.b16 %v790, %v786
  %v1019 = vpack.c.b16 %v795, %v791
  %v1020 = vpack.c.b16 %v796, %v792
  %v1021 = vpack.c.b16 %v797, %v793
  %v1022 = vpack.c.b16 %v798, %v794
  %v1023 = vpack.c.b16 %v803, %v799
  %v1024 = vpack.c.b16 %v804, %v800
  %v1025 = vpack.c.b16 %v805, %v801
  %v1026 = vpack.c.b16 %v806, %v802
  %v1027 = vpack.c.b16 %v811, %v807
  %v1028 = vpack.c.b16 %v812, %v808
  %v1029 = vpack.c.b16 %v813, %v809
  %v1030 = vpack.c.b16 %v814, %v810
  %v1031 = vpack.c.b16 %v819, %v815
  %v1032 = vpack.c.b16 %v820, %v816
  %v1033 = vpack.c.b16 %v821, %v817
  %v1034 = vpack.c.b16 %v822, %v818
  %v1035 = vpack.c.b16 %v827, %v823
  %v1036 = vpack.c.b16 %v828, %v824
  %v1037 = vpack.c.b16 %v829, %v825
  %v1038 = vpack.c.b16 %v830, %v826
  %v1039 = vpack.c.b16 %v835, %v831
  %v1040 = vpack.c.b16 %v836, %v832
  %v1041 = vpack.c.b16 %v837, %v833
  %v1042 = vpack.c.b16 %v838, %v834
  %v1043 = vpack.c.b16 %v843, %v839
  %v1044 = vpack.c.b16 %v844, %v840
  %v1045 = vpack.c.b16 %v845, %v841
  %v1046 = vpack.c.b16 %v846, %v842
  %v1047 = vpack.c.b16 %v851, %v847
  %v1048 = vpack.c.b16 %v852, %v848
  %v1049 = vpack.c.b16 %v853, %v849
  %v1050 = vpack.c.b16 %v854, %v850
  %vm1247 = vcmask 130048
  %v1249 = vsel %vm1247, %v260, 0
  %1251 = vmatprep.subr.bf16.mxu0 %v884
  %1252 = vmatpush1.bf16.msra.mxu0 %v883
  %1253 = vmatprep.subr.bf16.mxu0 %v880
  %1254 = vmatpush1.bf16.msra.mxu0 %v879
  %1255 = vmatprep.subr.bf16.mxu0 %v876
  %1256 = vmatpush1.bf16.msra.mxu0 %v875
  %1257 = vmatprep.subr.bf16.mxu0 %v872
  %1258 = vmatpush1.bf16.msra.mxu0 %v871
  %1259 = vmatprep.subr.bf16.mxu0 %v868
  %1260 = vmatpush1.bf16.msra.mxu0 %v867
  %1261 = vmatprep.subr.bf16.mxu0 %v864
  %1262 = vmatpush1.bf16.msra.mxu0 %v863
  %1263 = vmatprep.subr.bf16.mxu0 %v860
  %1264 = vmatpush1.bf16.msra.mxu0 %v859
  %1265 = vmatprep.subr.bf16.mxu0 %v856
  %1266 = vmatpush1.bf16.msra.mxu0 %v855
  %1267 = vmatprep.subr.bf16.mxu0 %v916
  %1268 = vmatpush2.bf16.msra.mxu0 %v915
  %1269 = vmatprep.subr.bf16.mxu0 %v912
  %1270 = vmatpush2.bf16.msra.mxu0 %v911
  %1271 = vmatprep.subr.bf16.mxu0 %v908
  %1272 = vmatpush2.bf16.msra.mxu0 %v907
  %1273 = vmatprep.subr.bf16.mxu0 %v904
  %1274 = vmatpush2.bf16.msra.mxu0 %v903
  %1275 = vmatprep.subr.bf16.mxu0 %v900
  %1276 = vmatpush2.bf16.msra.mxu0 %v899
  %1277 = vmatprep.subr.bf16.mxu0 %v896
  %1278 = vmatpush2.bf16.msra.mxu0 %v895
  %1279 = vmatprep.subr.bf16.mxu0 %v892
  %1280 = vmatpush2.bf16.msra.mxu0 %v891
  %1281 = vmatprep.subr.bf16.mxu0 %v888
  %1282 = vmatpush2.bf16.msra.mxu0 %v887
  %1283 = vmatprep.mubr.bf16.mxu0 %v255
  %1284 = vmatmul.mubr.bf16.gmra.mxu0 %v254
  %v1285 = vpop.f32.mrf.mxu0
  %v1286 = vadd.f32 %v226, %v1285
  %v1287 = vpop.f32.mrf.mxu0
  %v1288 = vadd.f32 %v230, %v1287
  %v1289 = vpop.f32.mrf.mxu0
  %v1290 = vpop.f32.mrf.mxu0
  %1291 = vdwg.mxu0
  %1292 = vmatprep.subr.bf16.mxu0 %v948
  %1293 = vmatpush1.bf16.msra.mxu0 %v947
  %1294 = vmatprep.subr.bf16.mxu0 %v944
  %1295 = vmatpush1.bf16.msra.mxu0 %v943
  %1296 = vmatprep.subr.bf16.mxu0 %v940
  %1297 = vmatpush1.bf16.msra.mxu0 %v939
  %1298 = vmatprep.subr.bf16.mxu0 %v936
  %1299 = vmatpush1.bf16.msra.mxu0 %v935
  %1300 = vmatprep.subr.bf16.mxu0 %v932
  %1301 = vmatpush1.bf16.msra.mxu0 %v931
  %1302 = vmatprep.subr.bf16.mxu0 %v928
  %1303 = vmatpush1.bf16.msra.mxu0 %v927
  %1304 = vmatprep.subr.bf16.mxu0 %v924
  %1305 = vmatpush1.bf16.msra.mxu0 %v923
  %1306 = vmatprep.subr.bf16.mxu0 %v920
  %1307 = vmatpush1.bf16.msra.mxu0 %v919
  %1308 = vmatprep.subr.bf16.mxu0 %v980
  %1309 = vmatpush2.bf16.msra.mxu0 %v979
  %1310 = vmatprep.subr.bf16.mxu0 %v976
  %1311 = vmatpush2.bf16.msra.mxu0 %v975
  %1312 = vmatprep.subr.bf16.mxu0 %v972
  %1313 = vmatpush2.bf16.msra.mxu0 %v971
  %1314 = vmatprep.subr.bf16.mxu0 %v968
  %1315 = vmatpush2.bf16.msra.mxu0 %v967
  %1316 = vmatprep.subr.bf16.mxu0 %v964
  %1317 = vmatpush2.bf16.msra.mxu0 %v963
  %1318 = vmatprep.subr.bf16.mxu0 %v960
  %1319 = vmatpush2.bf16.msra.mxu0 %v959
  %1320 = vmatprep.subr.bf16.mxu0 %v956
  %1321 = vmatpush2.bf16.msra.mxu0 %v955
  %1322 = vmatprep.subr.bf16.mxu0 %v952
  %1323 = vmatpush2.bf16.msra.mxu0 %v951
  %1324 = vmatprep.mubr.bf16.mxu0 %v257
  %1325 = vmatmul.mubr.bf16.gmra.mxu0 %v256
  %v1326 = vpop.f32.mrf.mxu0
  %v1327 = vadd.f32 %v1286, %v1326
  %v1328 = vpop.f32.mrf.mxu0
  %v1329 = vadd.f32 %v1288, %v1328
  %v1330 = vpop.f32.mrf.mxu0
  %v1331 = vpop.f32.mrf.mxu0
  %1332 = vdwg.mxu0
  %1333 = vmatprep.subr.bf16.mxu0 %v1012
  %1334 = vmatpush1.bf16.msra.mxu0 %v1011
  %1335 = vmatprep.subr.bf16.mxu0 %v1008
  %1336 = vmatpush1.bf16.msra.mxu0 %v1007
  %1337 = vmatprep.subr.bf16.mxu0 %v1004
  %1338 = vmatpush1.bf16.msra.mxu0 %v1003
  %1339 = vmatprep.subr.bf16.mxu0 %v1000
  %1340 = vmatpush1.bf16.msra.mxu0 %v999
  %1341 = vmatprep.subr.bf16.mxu0 %v996
  %1342 = vmatpush1.bf16.msra.mxu0 %v995
  %1343 = vmatprep.subr.bf16.mxu0 %v992
  %1344 = vmatpush1.bf16.msra.mxu0 %v991
  %1345 = vmatprep.subr.bf16.mxu0 %v988
  %1346 = vmatpush1.bf16.msra.mxu0 %v987
  %1347 = vmatprep.subr.bf16.mxu0 %v984
  %1348 = vmatpush1.bf16.msra.mxu0 %v983
  %1349 = vmatprep.subr.bf16.mxu0 %v1044
  %1350 = vmatpush2.bf16.msra.mxu0 %v1043
  %1351 = vmatprep.subr.bf16.mxu0 %v1040
  %1352 = vmatpush2.bf16.msra.mxu0 %v1039
  %1353 = vmatprep.subr.bf16.mxu0 %v1036
  %1354 = vmatpush2.bf16.msra.mxu0 %v1035
  %1355 = vmatprep.subr.bf16.mxu0 %v1032
  %1356 = vmatpush2.bf16.msra.mxu0 %v1031
  %1357 = vmatprep.subr.bf16.mxu0 %v1028
  %1358 = vmatpush2.bf16.msra.mxu0 %v1027
  %1359 = vmatprep.subr.bf16.mxu0 %v1024
  %1360 = vmatpush2.bf16.msra.mxu0 %v1023
  %1361 = vmatprep.subr.bf16.mxu0 %v1020
  %1362 = vmatpush2.bf16.msra.mxu0 %v1019
  %1363 = vmatprep.subr.bf16.mxu0 %v1016
  %1364 = vmatpush2.bf16.msra.mxu0 %v1015
  %1365 = vmatprep.mubr.bf16.mxu0 %v259
  %1366 = vmatmul.mubr.bf16.gmra.mxu0 %v258
  %v1367 = vpop.f32.mrf.mxu0
  %v1368 = vadd.f32 %v1327, %v1367
  %v1369 = vpop.f32.mrf.mxu0
  %v1370 = vadd.f32 %v1329, %v1369
  %v1371 = vpop.f32.mrf.mxu0
  %v1372 = vpop.f32.mrf.mxu0
  %1373 = vdwg.mxu0
  %1374 = vmatprep.subr.bf16.mxu0 0
  %1375 = vmatpush1.bf16.msra.mxu0 0
  %1376 = vmatprep.subr.bf16.mxu0 0
  %1377 = vmatpush1.bf16.msra.mxu0 0
  %1378 = vmatprep.subr.bf16.mxu0 0
  %1379 = vmatpush1.bf16.msra.mxu0 0
  %1380 = vmatprep.subr.bf16.mxu0 0
  %1381 = vmatpush1.bf16.msra.mxu0 0
  %1382 = vmatprep.subr.bf16.mxu0 0
  %1383 = vmatpush1.bf16.msra.mxu0 0
  %1384 = vmatprep.subr.bf16.mxu0 0
  %1385 = vmatpush1.bf16.msra.mxu0 0
  %1386 = vmatprep.subr.bf16.mxu0 0
  %1387 = vmatpush1.bf16.msra.mxu0 0
  %1388 = vmatprep.subr.bf16.mxu0 %v1048
  %1389 = vmatpush1.bf16.msra.mxu0 %v1047
  %1390 = vmatprep.subr.bf16.mxu0 0
  %1391 = vmatpush2.bf16.msra.mxu0 0
  %1392 = vmatprep.subr.bf16.mxu0 0
  %1393 = vmatpush2.bf16.msra.mxu0 0
  %1394 = vmatprep.subr.bf16.mxu0 0
  %1395 = vmatpush2.bf16.msra.mxu0 0
  %1396 = vmatprep.subr.bf16.mxu0 0
  %1397 = vmatpush2.bf16.msra.mxu0 0
  %1398 = vmatprep.subr.bf16.mxu0 0
  %1399 = vmatpush2.bf16.msra.mxu0 0
  %1400 = vmatprep.subr.bf16.mxu0 0
  %1401 = vmatpush2.bf16.msra.mxu0 0
  %1402 = vmatprep.subr.bf16.mxu0 0
  %1403 = vmatpush2.bf16.msra.mxu0 0
  %1404 = vmatprep.subr.bf16.mxu0 0
  %1405 = vmatpush2.bf16.msra.mxu0 0
  %1406 = vmatprep.mubr.bf16.mxu0 0
  %1407 = vmatmul.mubr.bf16.gmra.mxu0 %v1249
  %v1408 = vpop.f32.mrf.mxu0
  %v1409 = vadd.f32 %v1368, %v1408
  %v1410 = vpop.f32.mrf.mxu0
  %v1411 = vadd.f32 %v1370, %v1410
  %v1412 = vpop.f32.mrf.mxu0
  %v1413 = vpop.f32.mrf.mxu0
  %1414 = vdwg.mxu0
  %1415 = vmatprep.subr.bf16.mxu0 %v886
  %1416 = vmatpush1.bf16.msra.mxu0 %v885
  %1417 = vmatprep.subr.bf16.mxu0 %v882
  %1418 = vmatpush1.bf16.msra.mxu0 %v881
  %1419 = vmatprep.subr.bf16.mxu0 %v878
  %1420 = vmatpush1.bf16.msra.mxu0 %v877
  %1421 = vmatprep.subr.bf16.mxu0 %v874
  %1422 = vmatpush1.bf16.msra.mxu0 %v873
  %1423 = vmatprep.subr.bf16.mxu0 %v870
  %1424 = vmatpush1.bf16.msra.mxu0 %v869
  %1425 = vmatprep.subr.bf16.mxu0 %v866
  %1426 = vmatpush1.bf16.msra.mxu0 %v865
  %1427 = vmatprep.subr.bf16.mxu0 %v862
  %1428 = vmatpush1.bf16.msra.mxu0 %v861
  %1429 = vmatprep.subr.bf16.mxu0 %v858
  %1430 = vmatpush1.bf16.msra.mxu0 %v857
  %1431 = vmatprep.subr.bf16.mxu0 %v918
  %1432 = vmatpush2.bf16.msra.mxu0 %v917
  %1433 = vmatprep.subr.bf16.mxu0 %v914
  %1434 = vmatpush2.bf16.msra.mxu0 %v913
  %1435 = vmatprep.subr.bf16.mxu0 %v910
  %1436 = vmatpush2.bf16.msra.mxu0 %v909
  %1437 = vmatprep.subr.bf16.mxu0 %v906
  %1438 = vmatpush2.bf16.msra.mxu0 %v905
  %1439 = vmatprep.subr.bf16.mxu0 %v902
  %1440 = vmatpush2.bf16.msra.mxu0 %v901
  %1441 = vmatprep.subr.bf16.mxu0 %v898
  %1442 = vmatpush2.bf16.msra.mxu0 %v897
  %1443 = vmatprep.subr.bf16.mxu0 %v894
  %1444 = vmatpush2.bf16.msra.mxu0 %v893
  %1445 = vmatprep.subr.bf16.mxu0 %v890
  %1446 = vmatpush2.bf16.msra.mxu0 %v889
  %1447 = vmatprep.mubr.bf16.mxu0 %v255
  %1448 = vmatmul.mubr.bf16.gmra.mxu0 %v254
  %v1449 = vpop.f32.mrf.mxu0
  %v1450 = vadd.f32 %v234, %v1449
  %v1451 = vpop.f32.mrf.mxu0
  %v1452 = vadd.f32 %v238, %v1451
  %v1453 = vpop.f32.mrf.mxu0
  %v1454 = vpop.f32.mrf.mxu0
  %1455 = vdwg.mxu0
  %1456 = vmatprep.subr.bf16.mxu0 %v950
  %1457 = vmatpush1.bf16.msra.mxu0 %v949
  %1458 = vmatprep.subr.bf16.mxu0 %v946
  %1459 = vmatpush1.bf16.msra.mxu0 %v945
  %1460 = vmatprep.subr.bf16.mxu0 %v942
  %1461 = vmatpush1.bf16.msra.mxu0 %v941
  %1462 = vmatprep.subr.bf16.mxu0 %v938
  %1463 = vmatpush1.bf16.msra.mxu0 %v937
  %1464 = vmatprep.subr.bf16.mxu0 %v934
  %1465 = vmatpush1.bf16.msra.mxu0 %v933
  %1466 = vmatprep.subr.bf16.mxu0 %v930
  %1467 = vmatpush1.bf16.msra.mxu0 %v929
  %1468 = vmatprep.subr.bf16.mxu0 %v926
  %1469 = vmatpush1.bf16.msra.mxu0 %v925
  %1470 = vmatprep.subr.bf16.mxu0 %v922
  %1471 = vmatpush1.bf16.msra.mxu0 %v921
  %1472 = vmatprep.subr.bf16.mxu0 %v982
  %1473 = vmatpush2.bf16.msra.mxu0 %v981
  %1474 = vmatprep.subr.bf16.mxu0 %v978
  %1475 = vmatpush2.bf16.msra.mxu0 %v977
  %1476 = vmatprep.subr.bf16.mxu0 %v974
  %1477 = vmatpush2.bf16.msra.mxu0 %v973
  %1478 = vmatprep.subr.bf16.mxu0 %v970
  %1479 = vmatpush2.bf16.msra.mxu0 %v969
  %1480 = vmatprep.subr.bf16.mxu0 %v966
  %1481 = vmatpush2.bf16.msra.mxu0 %v965
  %1482 = vmatprep.subr.bf16.mxu0 %v962
  %1483 = vmatpush2.bf16.msra.mxu0 %v961
  %1484 = vmatprep.subr.bf16.mxu0 %v958
  %1485 = vmatpush2.bf16.msra.mxu0 %v957
  %1486 = vmatprep.subr.bf16.mxu0 %v954
  %1487 = vmatpush2.bf16.msra.mxu0 %v953
  %1488 = vmatprep.mubr.bf16.mxu0 %v257
  %1489 = vmatmul.mubr.bf16.gmra.mxu0 %v256
  %v1490 = vpop.f32.mrf.mxu0
  %v1491 = vadd.f32 %v1450, %v1490
  %v1492 = vpop.f32.mrf.mxu0
  %v1493 = vadd.f32 %v1452, %v1492
  %v1494 = vpop.f32.mrf.mxu0
  %v1495 = vpop.f32.mrf.mxu0
  %1496 = vdwg.mxu0
  %1497 = vmatprep.subr.bf16.mxu0 %v1014
  %1498 = vmatpush1.bf16.msra.mxu0 %v1013
  %1499 = vmatprep.subr.bf16.mxu0 %v1010
  %1500 = vmatpush1.bf16.msra.mxu0 %v1009
  %1501 = vmatprep.subr.bf16.mxu0 %v1006
  %1502 = vmatpush1.bf16.msra.mxu0 %v1005
  %1503 = vmatprep.subr.bf16.mxu0 %v1002
  %1504 = vmatpush1.bf16.msra.mxu0 %v1001
  %1505 = vmatprep.subr.bf16.mxu0 %v998
  %1506 = vmatpush1.bf16.msra.mxu0 %v997
  %1507 = vmatprep.subr.bf16.mxu0 %v994
  %1508 = vmatpush1.bf16.msra.mxu0 %v993
  %1509 = vmatprep.subr.bf16.mxu0 %v990
  %1510 = vmatpush1.bf16.msra.mxu0 %v989
  %1511 = vmatprep.subr.bf16.mxu0 %v986
  %1512 = vmatpush1.bf16.msra.mxu0 %v985
  %1513 = vmatprep.subr.bf16.mxu0 %v1046
  %1514 = vmatpush2.bf16.msra.mxu0 %v1045
  %1515 = vmatprep.subr.bf16.mxu0 %v1042
  %1516 = vmatpush2.bf16.msra.mxu0 %v1041
  %1517 = vmatprep.subr.bf16.mxu0 %v1038
  %1518 = vmatpush2.bf16.msra.mxu0 %v1037
  %1519 = vmatprep.subr.bf16.mxu0 %v1034
  %1520 = vmatpush2.bf16.msra.mxu0 %v1033
  %1521 = vmatprep.subr.bf16.mxu0 %v1030
  %1522 = vmatpush2.bf16.msra.mxu0 %v1029
  %1523 = vmatprep.subr.bf16.mxu0 %v1026
  %1524 = vmatpush2.bf16.msra.mxu0 %v1025
  %1525 = vmatprep.subr.bf16.mxu0 %v1022
  %1526 = vmatpush2.bf16.msra.mxu0 %v1021
  %1527 = vmatprep.subr.bf16.mxu0 %v1018
  %1528 = vmatpush2.bf16.msra.mxu0 %v1017
  %1529 = vmatprep.mubr.bf16.mxu0 %v259
  %1530 = vmatmul.mubr.bf16.gmra.mxu0 %v258
  %v1531 = vpop.f32.mrf.mxu0
  %v1532 = vadd.f32 %v1491, %v1531
  %v1533 = vpop.f32.mrf.mxu0
  %v1534 = vadd.f32 %v1493, %v1533
  %v1535 = vpop.f32.mrf.mxu0
  %v1536 = vpop.f32.mrf.mxu0
  %1537 = vdwg.mxu0
  %1538 = vmatprep.subr.bf16.mxu0 0
  %1539 = vmatpush1.bf16.msra.mxu0 0
  %1540 = vmatprep.subr.bf16.mxu0 0
  %1541 = vmatpush1.bf16.msra.mxu0 0
  %1542 = vmatprep.subr.bf16.mxu0 0
  %1543 = vmatpush1.bf16.msra.mxu0 0
  %1544 = vmatprep.subr.bf16.mxu0 0
  %1545 = vmatpush1.bf16.msra.mxu0 0
  %1546 = vmatprep.subr.bf16.mxu0 0
  %1547 = vmatpush1.bf16.msra.mxu0 0
  %1548 = vmatprep.subr.bf16.mxu0 0
  %1549 = vmatpush1.bf16.msra.mxu0 0
  %1550 = vmatprep.subr.bf16.mxu0 0
  %1551 = vmatpush1.bf16.msra.mxu0 0
  %1552 = vmatprep.subr.bf16.mxu0 %v1050
  %1553 = vmatpush1.bf16.msra.mxu0 %v1049
  %1554 = vmatprep.subr.bf16.mxu0 0
  %1555 = vmatpush2.bf16.msra.mxu0 0
  %1556 = vmatprep.subr.bf16.mxu0 0
  %1557 = vmatpush2.bf16.msra.mxu0 0
  %1558 = vmatprep.subr.bf16.mxu0 0
  %1559 = vmatpush2.bf16.msra.mxu0 0
  %1560 = vmatprep.subr.bf16.mxu0 0
  %1561 = vmatpush2.bf16.msra.mxu0 0
  %1562 = vmatprep.subr.bf16.mxu0 0
  %1563 = vmatpush2.bf16.msra.mxu0 0
  %1564 = vmatprep.subr.bf16.mxu0 0
  %1565 = vmatpush2.bf16.msra.mxu0 0
  %1566 = vmatprep.subr.bf16.mxu0 0
  %1567 = vmatpush2.bf16.msra.mxu0 0
  %1568 = vmatprep.subr.bf16.mxu0 0
  %1569 = vmatpush2.bf16.msra.mxu0 0
  %1570 = vmatprep.mubr.bf16.mxu0 0
  %1571 = vmatmul.mubr.bf16.gmra.mxu0 %v1249
  %v1572 = vpop.f32.mrf.mxu0
  %v1573 = vadd.f32 %v1532, %v1572
  %v1574 = vpop.f32.mrf.mxu0
  %v1575 = vadd.f32 %v1534, %v1574
  %v1576 = vpop.f32.mrf.mxu0
  %v1577 = vpop.f32.mrf.mxu0
  %1578 = vdwg.mxu0
  %v1579 = vmax.f32 %v1409, 0.0
  %v1580 = vmax.f32 %v1411, 0.0
  %v1581 = vmax.f32 %v1573, 0.0
  %v1582 = vmax.f32 %v1575, 0.0
  %v1583 = vpack.c.bf16 %v1579, %v1579
  %v1584 = vpack.c.bf16 %v1580, %v1580
  %v1585 = vpack.c.bf16 %v1581, %v1581
  %v1586 = vpack.c.bf16 %v1582, %v1582
  %v1587 = vld [vmem:[%s3] sm:$0xf]
  %v1588 = vld [vmem:[%s3 + $0x4] sm:$0xf]
  %v1589 = vld [vmem:[%s3 + $0x8] sm:$0xf]
  %v1590 = vld [vmem:[%s3 + $0xc] sm:$0xf]
  %v1591 = vld [vmem:[%s3 + $0x10] sm:$0xf]
  %v1592 = vld [vmem:[%s3 + $0x14] sm:$0xf]
  %v1593 = vld [vmem:[%s3 + $0x18] sm:$0xf]
  %v1594 = vld [vmem:[%s3 + $0x1c] sm:$0xf]
  %v1595 = vld [vmem:[%s3 + $0x20] sm:$0xf]
  %v1596 = vld [vmem:[%s3 + $0x24] sm:$0xf]
  %v1597 = vld [vmem:[%s3 + $0x28] sm:$0xf]
  %v1598 = vld [vmem:[%s3 + $0x2c] sm:$0xf]
  %v1599 = vld [vmem:[%s3 + $0x30] sm:$0xf]
  %v1600 = vld [vmem:[%s3 + $0x34] sm:$0xf]
  %v1601 = vld [vmem:[%s3 + $0x38] sm:$0xf]
  %v1602 = vld [vmem:[%s3 + $0x3c] sm:$0xf]
  %v1603 = vld [vmem:[%s3 + $0x40] sm:$0xf]
  %v1604 = vld [vmem:[%s3 + $0x44] sm:$0xf]
  %v1605 = vld [vmem:[%s3 + $0x48] sm:$0xf]
  %v1606 = vld [vmem:[%s3 + $0x4c] sm:$0xf]
  %v1607 = vld [vmem:[%s3 + $0x50] sm:$0xf]
  %v1608 = vld [vmem:[%s3 + $0x54] sm:$0xf]
  %v1609 = vld [vmem:[%s3 + $0x58] sm:$0xf]
  %v1610 = vld [vmem:[%s3 + $0x5c] sm:$0xf]
  %v1611 = vld [vmem:[%s3 + $0x60] sm:$0xf]
  %v1612 = vld [vmem:[%s3 + $0x64] sm:$0xf]
  %v1613 = vld [vmem:[%s3 + $0x68] sm:$0xf]
  %v1614 = vld [vmem:[%s3 + $0x6c] sm:$0xf]
  %v1615 = vld [vmem:[%s3 + $0x70] sm:$0xf]
  %v1616 = vld [vmem:[%s3 + $0x74] sm:$0xf]
  %v1617 = vld [vmem:[%s3 + $0x78] sm:$0xf]
  %v1618 = vld [vmem:[%s3 + $0x7c] sm:$0xf]
  %v1619 = vld [vmem:[%s3 + $0x80] sm:$0xf]
  %v1620 = vld [vmem:[%s3 + $0x84] sm:$0xf]
  %v1621 = vld [vmem:[%s3 + $0x88] sm:$0xf]
  %v1622 = vld [vmem:[%s3 + $0x8c] sm:$0xf]
  %v1623 = vld [vmem:[%s3 + $0x90] sm:$0xf]
  %v1624 = vld [vmem:[%s3 + $0x94] sm:$0xf]
  %v1625 = vld [vmem:[%s3 + $0x98] sm:$0xf]
  %v1626 = vld [vmem:[%s3 + $0x9c] sm:$0xf]
  %v1627 = vld [vmem:[%s3 + $0xa0] sm:$0xf]
  %v1628 = vld [vmem:[%s3 + $0xa4] sm:$0xf]
  %v1629 = vld [vmem:[%s3 + $0xa8] sm:$0xf]
  %v1630 = vld [vmem:[%s3 + $0xac] sm:$0xf]
  %v1631 = vld [vmem:[%s3 + $0xb0] sm:$0xf]
  %v1632 = vld [vmem:[%s3 + $0xb4] sm:$0xf]
  %v1633 = vld [vmem:[%s3 + $0xb8] sm:$0xf]
  %v1634 = vld [vmem:[%s3 + $0xbc] sm:$0xf]
  %v1635 = vld [vmem:[%s3 + $0xc0] sm:$0xf]
  %v1636 = vld [vmem:[%s3 + $0xc4] sm:$0xf]
  %v1637 = vld [vmem:[%s3 + $0xc8] sm:$0xf]
  %v1638 = vld [vmem:[%s3 + $0xcc] sm:$0xf]
  %v1639 = vld [vmem:[%s3 + $0xd0] sm:$0xf]
  %v1640 = vld [vmem:[%s3 + $0xd4] sm:$0xf]
  %v1641 = vld [vmem:[%s3 + $0xd8] sm:$0xf]
  %v1642 = vld [vmem:[%s3 + $0xdc] sm:$0xf]
  %v1643 = vld [vmem:[%s3 + $0xe0] sm:$0xf]
  %v1644 = vld [vmem:[%s3 + $0xe4] sm:$0xf]
  %v1645 = vld [vmem:[%s3 + $0xe8] sm:$0xf]
  %v1646 = vld [vmem:[%s3 + $0xec] sm:$0xf]
  %v1647 = vld [vmem:[%s3 + $0xf0] sm:$0xf]
  %v1648 = vld [vmem:[%s3 + $0xf4] sm:$0xf]
  %v1649 = vld [vmem:[%s3 + $0xf8] sm:$0xf]
  %v1650 = vld [vmem:[%s3 + $0xfc] sm:$0xf]
  %v1651 = vld [vmem:[%s4] sm:$0x1]
  %v1653 = vlaneseq
  %v1654 = vshrl.u32 %v1653, 7
  %v1655 = vsub.s32 0, %v1654
  %v1656 = vrot.slane %v1651, %v1655
  %v1722 = vunpack.c.l.b16 %v1587
  %v1723 = vunpack.c.l.b16 %v1588
  %v1724 = vunpack.c.l.b16 %v1589
  %v1725 = vunpack.c.l.b16 %v1590
  %v1726 = vunpack.c.l.b16 %v1591
  %v1727 = vunpack.c.l.b16 %v1592
  %v1728 = vunpack.c.l.b16 %v1593
  %v1729 = vunpack.c.l.b16 %v1594
  %v1730 = vunpack.c.l.b16 %v1595
  %v1731 = vunpack.c.l.b16 %v1596
  %v1732 = vunpack.c.l.b16 %v1597
  %v1733 = vunpack.c.l.b16 %v1598
  %v1734 = vunpack.c.l.b16 %v1599
  %v1735 = vunpack.c.l.b16 %v1600
  %v1736 = vunpack.c.l.b16 %v1601
  %v1737 = vunpack.c.l.b16 %v1602
  %v1738 = vunpack.c.l.b16 %v1603
  %v1739 = vunpack.c.l.b16 %v1604
  %v1740 = vunpack.c.l.b16 %v1605
  %v1741 = vunpack.c.l.b16 %v1606
  %v1742 = vunpack.c.l.b16 %v1607
  %v1743 = vunpack.c.l.b16 %v1608
  %v1744 = vunpack.c.l.b16 %v1609
  %v1745 = vunpack.c.l.b16 %v1610
  %v1746 = vunpack.c.l.b16 %v1611
  %v1747 = vunpack.c.l.b16 %v1612
  %v1748 = vunpack.c.l.b16 %v1613
  %v1749 = vunpack.c.l.b16 %v1614
  %v1750 = vunpack.c.l.b16 %v1615
  %v1751 = vunpack.c.l.b16 %v1616
  %v1752 = vunpack.c.l.b16 %v1617
  %v1753 = vunpack.c.l.b16 %v1618
  %v1754 = vunpack.c.l.b16 %v1619
  %v1755 = vunpack.c.l.b16 %v1620
  %v1756 = vunpack.c.l.b16 %v1621
  %v1757 = vunpack.c.l.b16 %v1622
  %v1758 = vunpack.c.l.b16 %v1623
  %v1759 = vunpack.c.l.b16 %v1624
  %v1760 = vunpack.c.l.b16 %v1625
  %v1761 = vunpack.c.l.b16 %v1626
  %v1762 = vunpack.c.l.b16 %v1627
  %v1763 = vunpack.c.l.b16 %v1628
  %v1764 = vunpack.c.l.b16 %v1629
  %v1765 = vunpack.c.l.b16 %v1630
  %v1766 = vunpack.c.l.b16 %v1631
  %v1767 = vunpack.c.l.b16 %v1632
  %v1768 = vunpack.c.l.b16 %v1633
  %v1769 = vunpack.c.l.b16 %v1634
  %v1770 = vunpack.c.l.b16 %v1635
  %v1771 = vunpack.c.l.b16 %v1636
  %v1772 = vunpack.c.l.b16 %v1637
  %v1773 = vunpack.c.l.b16 %v1638
  %v1774 = vunpack.c.l.b16 %v1639
  %v1775 = vunpack.c.l.b16 %v1640
  %v1776 = vunpack.c.l.b16 %v1641
  %v1777 = vunpack.c.l.b16 %v1642
  %v1778 = vunpack.c.l.b16 %v1643
  %v1779 = vunpack.c.l.b16 %v1644
  %v1780 = vunpack.c.l.b16 %v1645
  %v1781 = vunpack.c.l.b16 %v1646
  %v1782 = vunpack.c.l.b16 %v1647
  %v1783 = vunpack.c.l.b16 %v1648
  %v1784 = vunpack.c.l.b16 %v1649
  %v1785 = vunpack.c.l.b16 %v1650
  %v1786 = vpack.c.b16 %v1723, %v1722
  %v1787 = vpack.c.b16 %v1725, %v1724
  %v1788 = vpack.c.b16 %v1727, %v1726
  %v1789 = vpack.c.b16 %v1729, %v1728
  %v1790 = vpack.c.b16 %v1731, %v1730
  %v1791 = vpack.c.b16 %v1733, %v1732
  %v1792 = vpack.c.b16 %v1735, %v1734
  %v1793 = vpack.c.b16 %v1737, %v1736
  %v1794 = vpack.c.b16 %v1739, %v1738
  %v1795 = vpack.c.b16 %v1741, %v1740
  %v1796 = vpack.c.b16 %v1743, %v1742
  %v1797 = vpack.c.b16 %v1745, %v1744
  %v1798 = vpack.c.b16 %v1747, %v1746
  %v1799 = vpack.c.b16 %v1749, %v1748
  %v1800 = vpack.c.b16 %v1751, %v1750
  %v1801 = vpack.c.b16 %v1753, %v1752
  %v1802 = vpack.c.b16 %v1755, %v1754
  %v1803 = vpack.c.b16 %v1757, %v1756
  %v1804 = vpack.c.b16 %v1759, %v1758
  %v1805 = vpack.c.b16 %v1761, %v1760
  %v1806 = vpack.c.b16 %v1763, %v1762
  %v1807 = vpack.c.b16 %v1765, %v1764
  %v1808 = vpack.c.b16 %v1767, %v1766
  %v1809 = vpack.c.b16 %v1769, %v1768
  %v1810 = vpack.c.b16 %v1771, %v1770
  %v1811 = vpack.c.b16 %v1773, %v1772
  %v1812 = vpack.c.b16 %v1775, %v1774
  %v1813 = vpack.c.b16 %v1777, %v1776
  %v1814 = vpack.c.b16 %v1779, %v1778
  %v1815 = vpack.c.b16 %v1781, %v1780
  %v1816 = vpack.c.b16 %v1783, %v1782
  %v1817 = vpack.c.b16 %v1785, %v1784
  %1850 = vmatprep.subr.bf16.mxu0 0
  %1851 = vmatpush1.bf16.msra.mxu0 %v1793
  %1852 = vmatprep.subr.bf16.mxu0 0
  %1853 = vmatpush1.bf16.msra.mxu0 %v1792
  %1854 = vmatprep.subr.bf16.mxu0 0
  %1855 = vmatpush1.bf16.msra.mxu0 %v1791
  %1856 = vmatprep.subr.bf16.mxu0 0
  %1857 = vmatpush1.bf16.msra.mxu0 %v1790
  %1858 = vmatprep.subr.bf16.mxu0 0
  %1859 = vmatpush1.bf16.msra.mxu0 %v1789
  %1860 = vmatprep.subr.bf16.mxu0 0
  %1861 = vmatpush1.bf16.msra.mxu0 %v1788
  %1862 = vmatprep.subr.bf16.mxu0 0
  %1863 = vmatpush1.bf16.msra.mxu0 %v1787
  %1864 = vmatprep.subr.bf16.mxu0 0
  %1865 = vmatpush1.bf16.msra.mxu0 %v1786
  %1866 = vmatprep.subr.bf16.mxu0 0
  %1867 = vmatpush2.bf16.msra.mxu0 %v1801
  %1868 = vmatprep.subr.bf16.mxu0 0
  %1869 = vmatpush2.bf16.msra.mxu0 %v1800
  %1870 = vmatprep.subr.bf16.mxu0 0
  %1871 = vmatpush2.bf16.msra.mxu0 %v1799
  %1872 = vmatprep.subr.bf16.mxu0 0
  %1873 = vmatpush2.bf16.msra.mxu0 %v1798
  %1874 = vmatprep.subr.bf16.mxu0 0
  %1875 = vmatpush2.bf16.msra.mxu0 %v1797
  %1876 = vmatprep.subr.bf16.mxu0 0
  %1877 = vmatpush2.bf16.msra.mxu0 %v1796
  %1878 = vmatprep.subr.bf16.mxu0 0
  %1879 = vmatpush2.bf16.msra.mxu0 %v1795
  %1880 = vmatprep.subr.bf16.mxu0 0
  %1881 = vmatpush2.bf16.msra.mxu0 %v1794
  %1882 = vmatprep.mubr.bf16.mxu0 %v1584
  %1883 = vmatmul.mubr.bf16.gmra.mxu0 %v1583
  %v1884 = vpop.f32.mrf.mxu0
  %v1885 = vadd.f32 %v1656, %v1884
  %v1886 = vpop.f32.mrf.mxu0
  %v1887 = vpop.f32.mrf.mxu0
  %v1888 = vpop.f32.mrf.mxu0
  %1889 = vdwg.mxu0
  %1890 = vmatprep.subr.bf16.mxu0 0
  %1891 = vmatpush1.bf16.msra.mxu0 %v1809
  %1892 = vmatprep.subr.bf16.mxu0 0
  %1893 = vmatpush1.bf16.msra.mxu0 %v1808
  %1894 = vmatprep.subr.bf16.mxu0 0
  %1895 = vmatpush1.bf16.msra.mxu0 %v1807
  %1896 = vmatprep.subr.bf16.mxu0 0
  %1897 = vmatpush1.bf16.msra.mxu0 %v1806
  %1898 = vmatprep.subr.bf16.mxu0 0
  %1899 = vmatpush1.bf16.msra.mxu0 %v1805
  %1900 = vmatprep.subr.bf16.mxu0 0
  %1901 = vmatpush1.bf16.msra.mxu0 %v1804
  %1902 = vmatprep.subr.bf16.mxu0 0
  %1903 = vmatpush1.bf16.msra.mxu0 %v1803
  %1904 = vmatprep.subr.bf16.mxu0 0
  %1905 = vmatpush1.bf16.msra.mxu0 %v1802
  %1906 = vmatprep.subr.bf16.mxu0 0
  %1907 = vmatpush2.bf16.msra.mxu0 %v1817
  %1908 = vmatprep.subr.bf16.mxu0 0
  %1909 = vmatpush2.bf16.msra.mxu0 %v1816
  %1910 = vmatprep.subr.bf16.mxu0 0
  %1911 = vmatpush2.bf16.msra.mxu0 %v1815
  %1912 = vmatprep.subr.bf16.mxu0 0
  %1913 = vmatpush2.bf16.msra.mxu0 %v1814
  %1914 = vmatprep.subr.bf16.mxu0 0
  %1915 = vmatpush2.bf16.msra.mxu0 %v1813
  %1916 = vmatprep.subr.bf16.mxu0 0
  %1917 = vmatpush2.bf16.msra.mxu0 %v1812
  %1918 = vmatprep.subr.bf16.mxu0 0
  %1919 = vmatpush2.bf16.msra.mxu0 %v1811
  %1920 = vmatprep.subr.bf16.mxu0 0
  %1921 = vmatpush2.bf16.msra.mxu0 %v1810
  %1922 = vmatprep.mubr.bf16.mxu0 %v1586
  %1923 = vmatmul.mubr.bf16.gmra.mxu0 %v1585
  %v1924 = vpop.f32.mrf.mxu0
  %v1925 = vadd.f32 %v1885, %v1924
  %v1926 = vpop.f32.mrf.mxu0
  %v1927 = vpop.f32.mrf.mxu0
  %v1928 = vpop.f32.mrf.mxu0
  %1929 = vdwg.mxu0
  %1930 = vst [vmem:[%s5] sm:$0xff] %v1925
  // Predicated region
  $region22: #{net_forward.1} parent=0 // pred_check
    _
  $region23: #{net_forward.1} parent=0 // pred_check_branch
    %1932 = sbr.rel (0) target = $region25
  $region24: #{net_forward.1} parent=0 // pred_region
    _
  $region25: #{net_forward.1} parent=0 // pred_fallthru
    _
  // Predicated region
  $region26: #{net_forward.1} parent=0 // pred_check
    _
  $region27: #{net_forward.1} parent=0 // pred_check_branch
    %1934 = sbr.rel (0) target = $region29
  $region28: #{net_forward.1} parent=0 // pred_region
    _
  $region29: #{net_forward.1} parent=0 // pred_fallthru
    _

</llo_original>
